<compile_context>
chip_gen: v7x
topology: tpu7x:2x2x1
jax: 0.10.0
libtpu: 0.0.40
codegen_flags: <defaults>
</compile_context>

<pallas_src>
import functools

import jax
import jax.numpy as jnp
import numpy as np
from jax.experimental import pallas as pl
from jax.experimental.pallas import tpu as pltpu

EPS = 1e-5


# ----------------------------------------------------------------------------
# Wrapper-side weight preprocessing: fold the 1-D (W) convolution, its padding
# and its stride into a banded matrix so the kernel does plain MXU matmuls on
# lane-dense (rows, W*C) slabs.
# ----------------------------------------------------------------------------
def banded_conv3x3(w, w_in, w_out, stride, dtype):
    """w: (3, 3, Cin, Cout) HWIO  ->  (3, w_in*Cin, w_out*Cout) banded matrices.

    B[dy][xw*Cin+ci, ow*Cout+co] = w[dy, xw - ow*stride + 1, ci, co]
    whenever that tap index lies in [0, 3); out-of-range taps (W padding) drop out.
    """
    kh, kw, cin, cout = w.shape
    xw = np.arange(w_in * cin) // cin
    ci = np.arange(w_in * cin) % cin
    ow = np.arange(w_out * cout) // cout
    co = np.arange(w_out * cout) % cout
    dx = xw[:, None] - (ow[None, :] * stride - 1)          # tap index 0..2
    valid = (dx >= 0) & (dx < kw)
    dxc = np.clip(dx, 0, kw - 1)
    vals = w[:, dxc, ci[:, None], co[None, :]]             # (3, rows, cols)
    return jnp.where(valid[None], vals, 0.0).astype(dtype)


def banded_conv1x1(wsc, w_in, w_out, stride, dtype):
    """wsc: (Cin, Cout)  ->  (w_in*Cin, w_out*Cout) banded matrix for the
    stride-s 1x1 projection shortcut (reads original column ow*stride)."""
    cin, cout = wsc.shape
    xw = np.arange(w_in * cin) // cin
    ci = np.arange(w_in * cin) % cin
    ow = np.arange(w_out * cout) // cout
    co = np.arange(w_out * cout) % cout
    valid = xw[:, None] == ow[None, :] * stride
    vals = wsc[ci[:, None], co[None, :]]                   # (rows, cols)
    return jnp.where(valid, vals, 0.0).astype(dtype)


# ----------------------------------------------------------------------------
# Kernel
# ----------------------------------------------------------------------------
def basic_block_kernel(x_ref, w1_ref, g1_ref, b1_ref, w2_ref, g2_ref, b2_ref,
                       red_ref, bc_ref, *rest,
                       stride, N, H, Hout, Wout, has_sc):
    if has_sc:
        wsc_ref, gsc_ref, bsc_ref, out_ref, xpad_ref, hpad_ref = rest
    else:
        out_ref, xpad_ref, hpad_ref = rest

    R = N * Hout                       # matmul rows (one per output image-row)
    Lx = xpad_ref.shape[-1]            # W * Cin   (lane-dense input rows)
    L = out_ref.shape[-1]              # Wout * planes (lane-dense output rows)
    count = float(N * Hout * Wout)     # BN sample count

    # ---- stage x with an H halo: zero ONLY the 2 border rows, copy interior ----
    xpad_ref[:, 0:1, :] = jnp.zeros((N, 1, Lx), jnp.float32)
    xpad_ref[:, H + 1:H + 2, :] = jnp.zeros((N, 1, Lx), jnp.float32)
    xpad_ref[:, 1:H + 1, :] = x_ref[...]

    def row_slab(ref, dy, s):
        # rows (n, oh*s + dy) of the padded buffer, flattened to (R, lanes)
        if s == 1:
            v = ref[:, pl.ds(dy, Hout), :]
        else:
            v = ref[:, pl.ds(dy, Hout, s), :]
        return v.reshape(R, ref.shape[-1])

    def conv_rows(src_ref, w_ref, s):
        # 3x3 conv = 3 banded bf16 MXU matmuls (one per kernel row), f32 acc.
        acc = jnp.dot(row_slab(src_ref, 0, s).astype(jnp.bfloat16), w_ref[0],
                      preferred_element_type=jnp.float32)
        for dy in (1, 2):
            acc = acc + jnp.dot(row_slab(src_ref, dy, s).astype(jnp.bfloat16),
                                w_ref[dy], preferred_element_type=jnp.float32)
        return acc

    def bn(a, gamma, beta):
        # training-mode BN, one-pass (sum, sum-of-squares) statistics in f32.
        colsum = jnp.sum(a, axis=0, keepdims=True)              # (1, L)
        colsq = jnp.sum(a * a, axis=0, keepdims=True)           # (1, L)
        s = jnp.dot(colsum, red_ref[...],                       # (1, C)
                    preferred_element_type=jnp.float32)
        sq = jnp.dot(colsq, red_ref[...],
                     preferred_element_type=jnp.float32)
        mean = s / count
        var = sq / count - mean * mean                          # biased var
        scale = gamma * jax.lax.rsqrt(var + EPS)                # (1, C)
        shift = beta - mean * scale
        scale_w = jnp.dot(scale, bc_ref[...],                   # (1, L)
                          preferred_element_type=jnp.float32)
        shift_w = jnp.dot(shift, bc_ref[...],
                          preferred_element_type=jnp.float32)
        return a * scale_w + shift_w

    # ---- conv1 (stride s, pad 1) + bn1 + relu ----
    a1 = conv_rows(xpad_ref, w1_ref, stride)
    h1 = jnp.maximum(bn(a1, g1_ref[...], b1_ref[...]), 0.0)     # (R, L)

    # ---- stage h1 with an H halo (border-only zeroing again) ----
    hpad_ref[:, 0:1, :] = jnp.zeros((N, 1, L), jnp.float32)
    hpad_ref[:, Hout + 1:Hout + 2, :] = jnp.zeros((N, 1, L), jnp.float32)
    hpad_ref[:, 1:Hout + 1, :] = h1.reshape(N, Hout, L)

    # ---- conv2 (stride 1, pad 1) + bn2 ----
    a2 = conv_rows(hpad_ref, w2_ref, 1)
    h2 = bn(a2, g2_ref[...], b2_ref[...])

    # ---- shortcut ----
    if has_sc:
        xs = row_slab(xpad_ref, 1, stride).astype(jnp.bfloat16)
        asc = jnp.dot(xs, wsc_ref[...], preferred_element_type=jnp.float32)
        sc = bn(asc, gsc_ref[...], bsc_ref[...])
    else:
        sc = row_slab(xpad_ref, 1, 1)          # identity (exact f32 copy of x)

    out_ref[...] = jnp.maximum(h2 + sc, 0.0)


# ----------------------------------------------------------------------------
# Wrapper
# ----------------------------------------------------------------------------
@functools.partial(jax.jit, static_argnums=(2,))
def basic_block_forward(x_nhwc, params, stride):
    N, H, W, cin = x_nhwc.shape
    planes = params["w1"].shape[-1]
    Hout = (H - 1) // stride + 1
    Wout = (W - 1) // stride + 1
    has_sc = (stride != 1) or (cin != planes)
    L = Wout * planes
    R = N * Hout

    # lane-dense operands (W and C folded into the minor dim); trivial reshape.
    x_rows = x_nhwc.reshape(N, H, W * cin)
    w1b = banded_conv3x3(params["w1"], W, Wout, stride, jnp.bfloat16)
    w2b = banded_conv3x3(params["w2"], Wout, Wout, 1, jnp.bfloat16)
    eye = jnp.eye(planes, dtype=jnp.float32)
    bc = jnp.tile(eye, (1, Wout))        # (planes, L): per-channel broadcast
    red = jnp.tile(eye, (Wout, 1))       # (L, planes): per-channel reduction

    args = [x_rows, w1b, params["g1"], params["b1"],
            w2b, params["g2"], params["b2"], red, bc]
    if has_sc:
        wscb = banded_conv1x1(params["wsc"], W, Wout, stride, jnp.bfloat16)
        args += [wscb, params["gsc"], params["bsc"]]

    kernel = functools.partial(
        basic_block_kernel, stride=stride, N=N, H=H, Hout=Hout, Wout=Wout,
        has_sc=has_sc)

    flops = 2 * R * L * (3 * W * cin + 3 * L + (W * cin if has_sc else 0))
    bytes_accessed = (x_rows.size + R * L) * 4 + (w1b.size + w2b.size) * 2

    vmem = pl.BlockSpec(memory_space=pltpu.MemorySpace.VMEM)
    out = pl.pallas_call(
        kernel,
        out_shape=jax.ShapeDtypeStruct((R, L), jnp.float32),   # lane-dense slab
        in_specs=[vmem] * len(args),
        out_specs=vmem,
        scratch_shapes=[
            pltpu.VMEM((N, H + 2, W * cin), jnp.float32),      # x with H halo
            pltpu.VMEM((N, Hout + 2, L), jnp.float32),         # h1 with H halo
        ],
        compiler_params=pltpu.CompilerParams(
            vmem_limit_bytes=32 * 1024 * 1024),
        cost_estimate=pl.CostEstimate(flops=flops, transcendentals=0,
                                      bytes_accessed=bytes_accessed),
    )(*args)
    return out.reshape(N, Hout, Wout, planes)


# ----------------------------------------------------------------------------
# Pure-JAX reference (conv_dtype lets us mirror the kernel's bf16 MXU operands
# for a tight check, or run the exact f32 module semantics).
# ----------------------------------------------------------------------------
def ref_forward(x_nhwc, params, stride, conv_dtype):
    dn = ("NHWC", "HWIO", "NHWC")
    cin = x_nhwc.shape[-1]
    planes = params["w1"].shape[-1]

    def conv(x, w, s, pad):
        return jax.lax.conv_general_dilated(
            x.astype(conv_dtype), w.astype(conv_dtype), (s, s), pad,
            dimension_numbers=dn, preferred_element_type=jnp.float32)

    def bn(h, g, b):
        mean = jnp.mean(h, axis=(0, 1, 2), keepdims=True)
        var = jnp.mean((h - mean) ** 2, axis=(0, 1, 2), keepdims=True)
        return (g.reshape(1, 1, 1, -1) * (h - mean) * jax.lax.rsqrt(var + EPS)
                + b.reshape(1, 1, 1, -1))

    out = jax.nn.relu(bn(conv(x_nhwc, params["w1"], stride, ((1, 1), (1, 1))),
                         params["g1"], params["b1"]))
    out = bn(conv(out, params["w2"], 1, ((1, 1), (1, 1))),
             params["g2"], params["b2"])
    if stride != 1 or cin != planes:
        sc = bn(conv(x_nhwc, params["wsc"].reshape(1, 1, cin, planes), stride,
                     ((0, 0), (0, 0))), params["gsc"], params["bsc"])
    else:
        sc = x_nhwc
    return jax.nn.relu(out + sc)


def init_params(key, in_planes, planes, stride):
    ks = jax.random.split(key, 10)
    p = {
        "w1": jax.random.normal(ks[0], (3, 3, in_planes, planes), jnp.float32)
              / np.sqrt(9 * in_planes),
        "g1": 1.0 + 0.1 * jax.random.normal(ks[1], (1, planes), jnp.float32),
        "b1": 0.1 * jax.random.normal(ks[2], (1, planes), jnp.float32),
        "w2": jax.random.normal(ks[3], (3, 3, planes, planes), jnp.float32)
              / np.sqrt(9 * planes),
        "g2": 1.0 + 0.1 * jax.random.normal(ks[4], (1, planes), jnp.float32),
        "b2": 0.1 * jax.random.normal(ks[5], (1, planes), jnp.float32),
    }
    if stride != 1 or in_planes != planes:
        p["wsc"] = (jax.random.normal(ks[6], (in_planes, planes), jnp.float32)
                    / np.sqrt(in_planes))
        p["gsc"] = 1.0 + 0.1 * jax.random.normal(ks[7], (1, planes), jnp.float32)
        p["bsc"] = 0.1 * jax.random.normal(ks[8], (1, planes), jnp.float32)
    return p


if __name__ == "__main__":
    key = jax.random.PRNGKey(0)
    kx, kp1, kp2 = jax.random.split(key, 3)

    # PyTorch-convention NCHW input; kernel works in a lane-dense NHWC-derived layout.
    x_nchw = jax.random.normal(kx, (2, 4, 16, 16), jnp.float32)
    x_nhwc = jnp.transpose(x_nchw, (0, 2, 3, 1))

    p1 = init_params(kp1, 4, 4, 1)   # stride=1, 4->4  : identity shortcut
    p2 = init_params(kp2, 4, 8, 2)   # stride=2, 4->8  : 1x1-conv + BN shortcut

    y1 = basic_block_forward(x_nhwc, p1, 1)
    y2 = basic_block_forward(x_nhwc, p2, 2)
    jax.block_until_ready((y1, y2))

    assert y1.shape == (2, 16, 16, 4), y1.shape
    assert y2.shape == (2, 8, 8, 8), y2.shape

    for y, p, s in ((y1, p1, 1), (y2, p2, 2)):
        y_np = np.asarray(y)
        # tight check: reference convs also use bf16 operands / f32 accumulation
        r_bf16 = np.asarray(ref_forward(x_nhwc, p, s, jnp.bfloat16))
        assert np.allclose(y_np, r_bf16, rtol=2e-2, atol=2e-2), (
            float(np.abs(y_np - r_bf16).max()))
        # module-semantics check (full f32 reference); gap is only bf16 MXU inputs
        r_f32 = np.asarray(ref_forward(x_nhwc, p, s, jnp.float32))
        assert np.allclose(y_np, r_f32, rtol=6e-2, atol=6e-2), (
            float(np.abs(y_np - r_f32).max()))

    print("KERNEL_OK")
</pallas_src>

<mosaic_0001>
module attributes {stable_mosaic.version = 11 : i64} {
  func.func @basic_block_kernel(%arg0: memref<2x16x64xf32, #tpu.memory_space<vmem>>, %arg1: memref<3x64x64xbf16, #tpu.memory_space<vmem>>, %arg2: memref<1x4xf32, #tpu.memory_space<vmem>>, %arg3: memref<1x4xf32, #tpu.memory_space<vmem>>, %arg4: memref<3x64x64xbf16, #tpu.memory_space<vmem>>, %arg5: memref<1x4xf32, #tpu.memory_space<vmem>>, %arg6: memref<1x4xf32, #tpu.memory_space<vmem>>, %arg7: memref<64x4xf32, #tpu.memory_space<vmem>>, %arg8: memref<4x64xf32, #tpu.memory_space<vmem>>, %arg9: memref<32x64xf32, #tpu.memory_space<vmem>>, %arg10: memref<2x18x64xf32, #tpu.memory_space<vmem>>, %arg11: memref<2x18x64xf32, #tpu.memory_space<vmem>>) attributes {dimension_semantics = [], scalar_prefetch = 0 : i64, scratch_operands = 2 : i64, tpu.core_type = #tpu.core_type<tc>} {
    %cst = arith.constant 0.000000e+00 : f32
    %0 = vector.broadcast %cst : f32 to vector<2x1x64xf32>
    %c0 = arith.constant 0 : index
    %c0_0 = arith.constant 0 : index
    %c0_1 = arith.constant 0 : index
    %1 = vector.load %arg10[%c0, %c0_0, %c0_1] : memref<2x18x64xf32, #tpu.memory_space<vmem>>, vector<2x1x64xf32>
    tpu.vector_store %arg10[%c0, %c0_0, %c0_1], %0 {strides = array<i32>} : memref<2x18x64xf32, #tpu.memory_space<vmem>>, vector<2x1x64xf32>,
    %cst_2 = arith.constant 0.000000e+00 : f32
    %2 = vector.broadcast %cst_2 : f32 to vector<2x1x64xf32>
    %c0_3 = arith.constant 0 : index
    %c17 = arith.constant 17 : index
    %c0_4 = arith.constant 0 : index
    %3 = vector.load %arg10[%c0_3, %c17, %c0_4] : memref<2x18x64xf32, #tpu.memory_space<vmem>>, vector<2x1x64xf32>
    tpu.vector_store %arg10[%c0_3, %c17, %c0_4], %2 {strides = array<i32>} : memref<2x18x64xf32, #tpu.memory_space<vmem>>, vector<2x1x64xf32>,
    %c0_5 = arith.constant 0 : index
    %c0_6 = arith.constant 0 : index
    %c0_7 = arith.constant 0 : index
    %4 = vector.load %arg0[%c0_5, %c0_6, %c0_7] : memref<2x16x64xf32, #tpu.memory_space<vmem>>, vector<2x16x64xf32>
    %c0_8 = arith.constant 0 : index
    %c1 = arith.constant 1 : index
    %c0_9 = arith.constant 0 : index
    %5 = vector.load %arg10[%c0_8, %c1, %c0_9] : memref<2x18x64xf32, #tpu.memory_space<vmem>>, vector<2x16x64xf32>
    tpu.vector_store %arg10[%c0_8, %c1, %c0_9], %4 {strides = array<i32>} : memref<2x18x64xf32, #tpu.memory_space<vmem>>, vector<2x16x64xf32>,
    %c0_10 = arith.constant 0 : index
    %c0_11 = arith.constant 0 : index
    %c0_12 = arith.constant 0 : index
    %6 = vector.load %arg10[%c0_10, %c0_11, %c0_12] : memref<2x18x64xf32, #tpu.memory_space<vmem>>, vector<2x16x64xf32>
    %7 = vector.shape_cast %6 : vector<2x16x64xf32> to vector<32x64xf32>
    %8 = arith.truncf %7 : vector<32x64xf32> to vector<32x64xbf16>
    %c0_13 = arith.constant 0 : index
    %c0_14 = arith.constant 0 : index
    %c0_15 = arith.constant 0 : index
    %9 = vector.load %arg1[%c0_13, %c0_14, %c0_15] : memref<3x64x64xbf16, #tpu.memory_space<vmem>>, vector<1x64x64xbf16>
    %10 = vector.shape_cast %9 : vector<1x64x64xbf16> to vector<64x64xbf16>
    %cst_16 = arith.constant dense<0.000000e+00> : vector<32x64xf32>
    %11 = tpu.matmul %8, %10, %cst_16 {dimension_numbers = #tpu.dot_dimension_numbers<[1], [0], [0], [1], [0, 0, 1, 1], [], []>} : vector<32x64xbf16>, vector<64x64xbf16>, vector<32x64xf32> -> vector<32x64xf32>
    %c0_17 = arith.constant 0 : index
    %c1_18 = arith.constant 1 : index
    %c0_19 = arith.constant 0 : index
    %12 = vector.load %arg10[%c0_17, %c1_18, %c0_19] : memref<2x18x64xf32, #tpu.memory_space<vmem>>, vector<2x16x64xf32>
    %13 = vector.shape_cast %12 : vector<2x16x64xf32> to vector<32x64xf32>
    %14 = arith.truncf %13 : vector<32x64xf32> to vector<32x64xbf16>
    %c1_20 = arith.constant 1 : index
    %c0_21 = arith.constant 0 : index
    %c0_22 = arith.constant 0 : index
    %15 = vector.load %arg1[%c1_20, %c0_21, %c0_22] : memref<3x64x64xbf16, #tpu.memory_space<vmem>>, vector<1x64x64xbf16>
    %16 = vector.shape_cast %15 : vector<1x64x64xbf16> to vector<64x64xbf16>
    %cst_23 = arith.constant dense<0.000000e+00> : vector<32x64xf32>
    %17 = tpu.matmul %14, %16, %cst_23 {dimension_numbers = #tpu.dot_dimension_numbers<[1], [0], [0], [1], [0, 0, 1, 1], [], []>} : vector<32x64xbf16>, vector<64x64xbf16>, vector<32x64xf32> -> vector<32x64xf32>
    %18 = arith.addf %11, %17 : vector<32x64xf32>
    %c0_24 = arith.constant 0 : index
    %c2 = arith.constant 2 : index
    %c0_25 = arith.constant 0 : index
    %19 = vector.load %arg10[%c0_24, %c2, %c0_25] : memref<2x18x64xf32, #tpu.memory_space<vmem>>, vector<2x16x64xf32>
    %20 = vector.shape_cast %19 : vector<2x16x64xf32> to vector<32x64xf32>
    %21 = arith.truncf %20 : vector<32x64xf32> to vector<32x64xbf16>
    %c2_26 = arith.constant 2 : index
    %c0_27 = arith.constant 0 : index
    %c0_28 = arith.constant 0 : index
    %22 = vector.load %arg1[%c2_26, %c0_27, %c0_28] : memref<3x64x64xbf16, #tpu.memory_space<vmem>>, vector<1x64x64xbf16>
    %23 = vector.shape_cast %22 : vector<1x64x64xbf16> to vector<64x64xbf16>
    %cst_29 = arith.constant dense<0.000000e+00> : vector<32x64xf32>
    %24 = tpu.matmul %21, %23, %cst_29 {dimension_numbers = #tpu.dot_dimension_numbers<[1], [0], [0], [1], [0, 0, 1, 1], [], []>} : vector<32x64xbf16>, vector<64x64xbf16>, vector<32x64xf32> -> vector<32x64xf32>
    %25 = arith.addf %18, %24 : vector<32x64xf32>
    %c0_30 = arith.constant 0 : index
    %c0_31 = arith.constant 0 : index
    %26 = vector.load %arg2[%c0_30, %c0_31] : memref<1x4xf32, #tpu.memory_space<vmem>>, vector<1x4xf32>
    %c0_32 = arith.constant 0 : index
    %c0_33 = arith.constant 0 : index
    %27 = vector.load %arg3[%c0_32, %c0_33] : memref<1x4xf32, #tpu.memory_space<vmem>>, vector<1x4xf32>
    %cst_34 = arith.constant dense<0.000000e+00> : vector<64xf32>
    %28 = vector.multi_reduction <add>, %25, %cst_34 [0] : vector<32x64xf32> to vector<64xf32>
    %29 = vector.shape_cast %28 : vector<64xf32> to vector<1x64xf32>
    %30 = arith.mulf %25, %25 : vector<32x64xf32>
    %cst_35 = arith.constant dense<0.000000e+00> : vector<64xf32>
    %31 = vector.multi_reduction <add>, %30, %cst_35 [0] : vector<32x64xf32> to vector<64xf32>
    %32 = vector.shape_cast %31 : vector<64xf32> to vector<1x64xf32>
    %c0_36 = arith.constant 0 : index
    %c0_37 = arith.constant 0 : index
    %33 = vector.load %arg7[%c0_36, %c0_37] : memref<64x4xf32, #tpu.memory_space<vmem>>, vector<64x4xf32>
    %cst_38 = arith.constant dense<0.000000e+00> : vector<1x4xf32>
    %34 = tpu.matmul %29, %33, %cst_38 {dimension_numbers = #tpu.dot_dimension_numbers<[1], [0], [0], [1], [0, 0, 1, 1], [], []>} : vector<1x64xf32>, vector<64x4xf32>, vector<1x4xf32> -> vector<1x4xf32>
    %c0_39 = arith.constant 0 : index
    %c0_40 = arith.constant 0 : index
    %35 = vector.load %arg7[%c0_39, %c0_40] : memref<64x4xf32, #tpu.memory_space<vmem>>, vector<64x4xf32>
    %cst_41 = arith.constant dense<0.000000e+00> : vector<1x4xf32>
    %36 = tpu.matmul %32, %35, %cst_41 {dimension_numbers = #tpu.dot_dimension_numbers<[1], [0], [0], [1], [0, 0, 1, 1], [], []>} : vector<1x64xf32>, vector<64x4xf32>, vector<1x4xf32> -> vector<1x4xf32>
    %cst_42 = arith.constant 5.120000e+02 : f32
    %37 = vector.broadcast %cst_42 : f32 to vector<1x4xf32>
    %38 = arith.divf %34, %37 : vector<1x4xf32>
    %cst_43 = arith.constant 5.120000e+02 : f32
    %39 = vector.broadcast %cst_43 : f32 to vector<1x4xf32>
    %40 = arith.divf %36, %39 : vector<1x4xf32>
    %41 = arith.mulf %38, %38 : vector<1x4xf32>
    %42 = arith.subf %40, %41 : vector<1x4xf32>
    %cst_44 = arith.constant 9.99999974E-6 : f32
    %43 = vector.broadcast %cst_44 : f32 to vector<1x4xf32>
    %44 = arith.addf %42, %43 : vector<1x4xf32>
    %45 = math.rsqrt %44 : vector<1x4xf32>
    %46 = arith.mulf %26, %45 : vector<1x4xf32>
    %47 = arith.mulf %38, %46 : vector<1x4xf32>
    %48 = arith.subf %27, %47 : vector<1x4xf32>
    %c0_45 = arith.constant 0 : index
    %c0_46 = arith.constant 0 : index
    %49 = vector.load %arg8[%c0_45, %c0_46] : memref<4x64xf32, #tpu.memory_space<vmem>>, vector<4x64xf32>
    %cst_47 = arith.constant dense<0.000000e+00> : vector<1x64xf32>
    %50 = tpu.matmul %46, %49, %cst_47 {dimension_numbers = #tpu.dot_dimension_numbers<[1], [0], [0], [1], [0, 0, 1, 1], [], []>} : vector<1x4xf32>, vector<4x64xf32>, vector<1x64xf32> -> vector<1x64xf32>
    %c0_48 = arith.constant 0 : index
    %c0_49 = arith.constant 0 : index
    %51 = vector.load %arg8[%c0_48, %c0_49] : memref<4x64xf32, #tpu.memory_space<vmem>>, vector<4x64xf32>
    %cst_50 = arith.constant dense<0.000000e+00> : vector<1x64xf32>
    %52 = tpu.matmul %48, %51, %cst_50 {dimension_numbers = #tpu.dot_dimension_numbers<[1], [0], [0], [1], [0, 0, 1, 1], [], []>} : vector<1x4xf32>, vector<4x64xf32>, vector<1x64xf32> -> vector<1x64xf32>
    %53 = vector.broadcast %50 : vector<1x64xf32> to vector<32x64xf32>
    %54 = arith.mulf %25, %53 : vector<32x64xf32>
    %55 = vector.broadcast %52 : vector<1x64xf32> to vector<32x64xf32>
    %56 = arith.addf %54, %55 : vector<32x64xf32>
    %cst_51 = arith.constant 0.000000e+00 : f32
    %57 = vector.broadcast %cst_51 : f32 to vector<32x64xf32>
    %58 = arith.maximumf %56, %57 : vector<32x64xf32>
    %cst_52 = arith.constant 0.000000e+00 : f32
    %59 = vector.broadcast %cst_52 : f32 to vector<2x1x64xf32>
    %c0_53 = arith.constant 0 : index
    %c0_54 = arith.constant 0 : index
    %c0_55 = arith.constant 0 : index
    %60 = vector.load %arg11[%c0_53, %c0_54, %c0_55] : memref<2x18x64xf32, #tpu.memory_space<vmem>>, vector<2x1x64xf32>
    tpu.vector_store %arg11[%c0_53, %c0_54, %c0_55], %59 {strides = array<i32>} : memref<2x18x64xf32, #tpu.memory_space<vmem>>, vector<2x1x64xf32>,
    %cst_56 = arith.constant 0.000000e+00 : f32
    %61 = vector.broadcast %cst_56 : f32 to vector<2x1x64xf32>
    %c0_57 = arith.constant 0 : index
    %c17_58 = arith.constant 17 : index
    %c0_59 = arith.constant 0 : index
    %62 = vector.load %arg11[%c0_57, %c17_58, %c0_59] : memref<2x18x64xf32, #tpu.memory_space<vmem>>, vector<2x1x64xf32>
    tpu.vector_store %arg11[%c0_57, %c17_58, %c0_59], %61 {strides = array<i32>} : memref<2x18x64xf32, #tpu.memory_space<vmem>>, vector<2x1x64xf32>,
    %63 = vector.shape_cast %58 : vector<32x64xf32> to vector<2x16x64xf32>
    %c0_60 = arith.constant 0 : index
    %c1_61 = arith.constant 1 : index
    %c0_62 = arith.constant 0 : index
    %64 = vector.load %arg11[%c0_60, %c1_61, %c0_62] : memref<2x18x64xf32, #tpu.memory_space<vmem>>, vector<2x16x64xf32>
    tpu.vector_store %arg11[%c0_60, %c1_61, %c0_62], %63 {strides = array<i32>} : memref<2x18x64xf32, #tpu.memory_space<vmem>>, vector<2x16x64xf32>,
    %c0_63 = arith.constant 0 : index
    %c0_64 = arith.constant 0 : index
    %c0_65 = arith.constant 0 : index
    %65 = vector.load %arg11[%c0_63, %c0_64, %c0_65] : memref<2x18x64xf32, #tpu.memory_space<vmem>>, vector<2x16x64xf32>
    %66 = vector.shape_cast %65 : vector<2x16x64xf32> to vector<32x64xf32>
    %67 = arith.truncf %66 : vector<32x64xf32> to vector<32x64xbf16>
    %c0_66 = arith.constant 0 : index
    %c0_67 = arith.constant 0 : index
    %c0_68 = arith.constant 0 : index
    %68 = vector.load %arg4[%c0_66, %c0_67, %c0_68] : memref<3x64x64xbf16, #tpu.memory_space<vmem>>, vector<1x64x64xbf16>
    %69 = vector.shape_cast %68 : vector<1x64x64xbf16> to vector<64x64xbf16>
    %cst_69 = arith.constant dense<0.000000e+00> : vector<32x64xf32>
    %70 = tpu.matmul %67, %69, %cst_69 {dimension_numbers = #tpu.dot_dimension_numbers<[1], [0], [0], [1], [0, 0, 1, 1], [], []>} : vector<32x64xbf16>, vector<64x64xbf16>, vector<32x64xf32> -> vector<32x64xf32>
    %c0_70 = arith.constant 0 : index
    %c1_71 = arith.constant 1 : index
    %c0_72 = arith.constant 0 : index
    %71 = vector.load %arg11[%c0_70, %c1_71, %c0_72] : memref<2x18x64xf32, #tpu.memory_space<vmem>>, vector<2x16x64xf32>
    %72 = vector.shape_cast %71 : vector<2x16x64xf32> to vector<32x64xf32>
    %73 = arith.truncf %72 : vector<32x64xf32> to vector<32x64xbf16>
    %c1_73 = arith.constant 1 : index
    %c0_74 = arith.constant 0 : index
    %c0_75 = arith.constant 0 : index
    %74 = vector.load %arg4[%c1_73, %c0_74, %c0_75] : memref<3x64x64xbf16, #tpu.memory_space<vmem>>, vector<1x64x64xbf16>
    %75 = vector.shape_cast %74 : vector<1x64x64xbf16> to vector<64x64xbf16>
    %cst_76 = arith.constant dense<0.000000e+00> : vector<32x64xf32>
    %76 = tpu.matmul %73, %75, %cst_76 {dimension_numbers = #tpu.dot_dimension_numbers<[1], [0], [0], [1], [0, 0, 1, 1], [], []>} : vector<32x64xbf16>, vector<64x64xbf16>, vector<32x64xf32> -> vector<32x64xf32>
    %77 = arith.addf %70, %76 : vector<32x64xf32>
    %c0_77 = arith.constant 0 : index
    %c2_78 = arith.constant 2 : index
    %c0_79 = arith.constant 0 : index
    %78 = vector.load %arg11[%c0_77, %c2_78, %c0_79] : memref<2x18x64xf32, #tpu.memory_space<vmem>>, vector<2x16x64xf32>
    %79 = vector.shape_cast %78 : vector<2x16x64xf32> to vector<32x64xf32>
    %80 = arith.truncf %79 : vector<32x64xf32> to vector<32x64xbf16>
    %c2_80 = arith.constant 2 : index
    %c0_81 = arith.constant 0 : index
    %c0_82 = arith.constant 0 : index
    %81 = vector.load %arg4[%c2_80, %c0_81, %c0_82] : memref<3x64x64xbf16, #tpu.memory_space<vmem>>, vector<1x64x64xbf16>
    %82 = vector.shape_cast %81 : vector<1x64x64xbf16> to vector<64x64xbf16>
    %cst_83 = arith.constant dense<0.000000e+00> : vector<32x64xf32>
    %83 = tpu.matmul %80, %82, %cst_83 {dimension_numbers = #tpu.dot_dimension_numbers<[1], [0], [0], [1], [0, 0, 1, 1], [], []>} : vector<32x64xbf16>, vector<64x64xbf16>, vector<32x64xf32> -> vector<32x64xf32>
    %84 = arith.addf %77, %83 : vector<32x64xf32>
    %c0_84 = arith.constant 0 : index
    %c0_85 = arith.constant 0 : index
    %85 = vector.load %arg5[%c0_84, %c0_85] : memref<1x4xf32, #tpu.memory_space<vmem>>, vector<1x4xf32>
    %c0_86 = arith.constant 0 : index
    %c0_87 = arith.constant 0 : index
    %86 = vector.load %arg6[%c0_86, %c0_87] : memref<1x4xf32, #tpu.memory_space<vmem>>, vector<1x4xf32>
    %cst_88 = arith.constant dense<0.000000e+00> : vector<64xf32>
    %87 = vector.multi_reduction <add>, %84, %cst_88 [0] : vector<32x64xf32> to vector<64xf32>
    %88 = vector.shape_cast %87 : vector<64xf32> to vector<1x64xf32>
    %89 = arith.mulf %84, %84 : vector<32x64xf32>
    %cst_89 = arith.constant dense<0.000000e+00> : vector<64xf32>
    %90 = vector.multi_reduction <add>, %89, %cst_89 [0] : vector<32x64xf32> to vector<64xf32>
    %91 = vector.shape_cast %90 : vector<64xf32> to vector<1x64xf32>
    %c0_90 = arith.constant 0 : index
    %c0_91 = arith.constant 0 : index
    %92 = vector.load %arg7[%c0_90, %c0_91] : memref<64x4xf32, #tpu.memory_space<vmem>>, vector<64x4xf32>
    %cst_92 = arith.constant dense<0.000000e+00> : vector<1x4xf32>
    %93 = tpu.matmul %88, %92, %cst_92 {dimension_numbers = #tpu.dot_dimension_numbers<[1], [0], [0], [1], [0, 0, 1, 1], [], []>} : vector<1x64xf32>, vector<64x4xf32>, vector<1x4xf32> -> vector<1x4xf32>
    %c0_93 = arith.constant 0 : index
    %c0_94 = arith.constant 0 : index
    %94 = vector.load %arg7[%c0_93, %c0_94] : memref<64x4xf32, #tpu.memory_space<vmem>>, vector<64x4xf32>
    %cst_95 = arith.constant dense<0.000000e+00> : vector<1x4xf32>
    %95 = tpu.matmul %91, %94, %cst_95 {dimension_numbers = #tpu.dot_dimension_numbers<[1], [0], [0], [1], [0, 0, 1, 1], [], []>} : vector<1x64xf32>, vector<64x4xf32>, vector<1x4xf32> -> vector<1x4xf32>
    %cst_96 = arith.constant 5.120000e+02 : f32
    %96 = vector.broadcast %cst_96 : f32 to vector<1x4xf32>
    %97 = arith.divf %93, %96 : vector<1x4xf32>
    %cst_97 = arith.constant 5.120000e+02 : f32
    %98 = vector.broadcast %cst_97 : f32 to vector<1x4xf32>
    %99 = arith.divf %95, %98 : vector<1x4xf32>
    %100 = arith.mulf %97, %97 : vector<1x4xf32>
    %101 = arith.subf %99, %100 : vector<1x4xf32>
    %cst_98 = arith.constant 9.99999974E-6 : f32
    %102 = vector.broadcast %cst_98 : f32 to vector<1x4xf32>
    %103 = arith.addf %101, %102 : vector<1x4xf32>
    %104 = math.rsqrt %103 : vector<1x4xf32>
    %105 = arith.mulf %85, %104 : vector<1x4xf32>
    %106 = arith.mulf %97, %105 : vector<1x4xf32>
    %107 = arith.subf %86, %106 : vector<1x4xf32>
    %c0_99 = arith.constant 0 : index
    %c0_100 = arith.constant 0 : index
    %108 = vector.load %arg8[%c0_99, %c0_100] : memref<4x64xf32, #tpu.memory_space<vmem>>, vector<4x64xf32>
    %cst_101 = arith.constant dense<0.000000e+00> : vector<1x64xf32>
    %109 = tpu.matmul %105, %108, %cst_101 {dimension_numbers = #tpu.dot_dimension_numbers<[1], [0], [0], [1], [0, 0, 1, 1], [], []>} : vector<1x4xf32>, vector<4x64xf32>, vector<1x64xf32> -> vector<1x64xf32>
    %c0_102 = arith.constant 0 : index
    %c0_103 = arith.constant 0 : index
    %110 = vector.load %arg8[%c0_102, %c0_103] : memref<4x64xf32, #tpu.memory_space<vmem>>, vector<4x64xf32>
    %cst_104 = arith.constant dense<0.000000e+00> : vector<1x64xf32>
    %111 = tpu.matmul %107, %110, %cst_104 {dimension_numbers = #tpu.dot_dimension_numbers<[1], [0], [0], [1], [0, 0, 1, 1], [], []>} : vector<1x4xf32>, vector<4x64xf32>, vector<1x64xf32> -> vector<1x64xf32>
    %112 = vector.broadcast %109 : vector<1x64xf32> to vector<32x64xf32>
    %113 = arith.mulf %84, %112 : vector<32x64xf32>
    %114 = vector.broadcast %111 : vector<1x64xf32> to vector<32x64xf32>
    %115 = arith.addf %113, %114 : vector<32x64xf32>
    %c0_105 = arith.constant 0 : index
    %c1_106 = arith.constant 1 : index
    %c0_107 = arith.constant 0 : index
    %116 = vector.load %arg10[%c0_105, %c1_106, %c0_107] : memref<2x18x64xf32, #tpu.memory_space<vmem>>, vector<2x16x64xf32>
    %117 = vector.shape_cast %116 : vector<2x16x64xf32> to vector<32x64xf32>
    %118 = arith.addf %115, %117 : vector<32x64xf32>
    %cst_108 = arith.constant 0.000000e+00 : f32
    %119 = vector.broadcast %cst_108 : f32 to vector<32x64xf32>
    %120 = arith.maximumf %118, %119 : vector<32x64xf32>
    %c0_109 = arith.constant 0 : index
    %c0_110 = arith.constant 0 : index
    %121 = vector.load %arg9[%c0_109, %c0_110] : memref<32x64xf32, #tpu.memory_space<vmem>>, vector<32x64xf32>
    tpu.vector_store %arg9[%c0_109, %c0_110], %120 {strides = array<i32>} : memref<32x64xf32, #tpu.memory_space<vmem>>, vector<32x64xf32>,
    return
  }
}

</mosaic_0001>

<llo_original>
// kernel: tile.14
$region0: #{tile.14}
  %s0 = inlined_call_operand.vmem [shape: f32[4,16,4], index: 0, kind: input, shape index: {}]
  %s1 = inlined_call_operand.vmem [shape: f32[4,64], index: 1, kind: output, shape index: {}]
  $region1: #{tile.14} parent=0
    #allocation0 [shape = 'u8[4096]{0}', space=vmem, size = 0x1000, scoped, tag = 'scoped mem for output reshape']
    %s2 = smov 3
    %v3 = vld [vmem:[%s0] ss:$16 sm:%s2]
    %s4 = smov 12
    %v5 = vld [vmem:[%s0] ss:$16 sm:%s4]
    %vm6 = vcmask 1043458
    %v7 = vsel %vm6, %v5, %v3
    %vm8 = vcmask 31744
    %9 = vst.msk [vmem:[#allocation0] sm:$0xf] %vm8, %v7
    %s10 = scalar_lea.vmem %s0, 15
    %s11 = smov 3
    %v12 = vld [vmem:[%s10] ss:$16 sm:%s11]
    %s13 = scalar_lea.vmem %s0, 15
    %s14 = smov 12
    %v15 = vld [vmem:[%s13] ss:$16 sm:%s14]
    %vm16 = vcmask 1043458
    %v17 = vsel %vm16, %v15, %v12
    %18 = vrot.lane.b32.xlu0 %v17, 60
    %v19 = vpop.permute.xlu0 %18
    %vm20 = vcmask 523744
    %21 = vst.msk [vmem:[#allocation0] sm:$0xf] %vm20, %v19
    %s22 = scalar_lea.vmem %s0, 14
    %s23 = smov 3
    %v24 = vld [vmem:[%s22] ss:$16 sm:%s23]
    %s25 = scalar_lea.vmem %s0, 14
    %s26 = smov 12
    %v27 = vld [vmem:[%s25] ss:$16 sm:%s26]
    %vm28 = vcmask 1043458
    %v29 = vsel %vm28, %v27, %v24
    %30 = vrot.lane.b32.xlu0 %v29, 56
    %v31 = vpop.permute.xlu0 %30
    %vm32 = vcmask 490944
    %33 = vst.msk [vmem:[#allocation0] sm:$0xf] %vm32, %v31
    %s34 = scalar_lea.vmem %s0, 13
    %s35 = smov 3
    %v36 = vld [vmem:[%s34] ss:$16 sm:%s35]
    %s37 = scalar_lea.vmem %s0, 13
    %s38 = smov 12
    %v39 = vld [vmem:[%s37] ss:$16 sm:%s38]
    %vm40 = vcmask 1043458
    %v41 = vsel %vm40, %v39, %v36
    %42 = vrot.lane.b32.xlu0 %v41, 52
    %v43 = vpop.permute.xlu0 %42
    %vm44 = vcmask 458144
    %45 = vst.msk [vmem:[#allocation0] sm:$0xf] %vm44, %v43
    %s46 = scalar_lea.vmem %s0, 12
    %s47 = smov 3
    %v48 = vld [vmem:[%s46] ss:$16 sm:%s47]
    %s49 = scalar_lea.vmem %s0, 12
    %s50 = smov 12
    %v51 = vld [vmem:[%s49] ss:$16 sm:%s50]
    %vm52 = vcmask 1043458
    %v53 = vsel %vm52, %v51, %v48
    %54 = vrot.lane.b32.xlu0 %v53, 48
    %v55 = vpop.permute.xlu0 %54
    %vm56 = vcmask 425344
    %57 = vst.msk [vmem:[#allocation0] sm:$0xf] %vm56, %v55
    %s58 = scalar_lea.vmem %s0, 11
    %s59 = smov 3
    %v60 = vld [vmem:[%s58] ss:$16 sm:%s59]
    %s61 = scalar_lea.vmem %s0, 11
    %s62 = smov 12
    %v63 = vld [vmem:[%s61] ss:$16 sm:%s62]
    %vm64 = vcmask 1043458
    %v65 = vsel %vm64, %v63, %v60
    %66 = vrot.lane.b32.xlu0 %v65, 44
    %v67 = vpop.permute.xlu0 %66
    %vm68 = vcmask 392544
    %69 = vst.msk [vmem:[#allocation0] sm:$0xf] %vm68, %v67
    %s70 = scalar_lea.vmem %s0, 10
    %s71 = smov 3
    %v72 = vld [vmem:[%s70] ss:$16 sm:%s71]
    %s73 = scalar_lea.vmem %s0, 10
    %s74 = smov 12
    %v75 = vld [vmem:[%s73] ss:$16 sm:%s74]
    %vm76 = vcmask 1043458
    %v77 = vsel %vm76, %v75, %v72
    %78 = vrot.lane.b32.xlu0 %v77, 40
    %v79 = vpop.permute.xlu0 %78
    %vm80 = vcmask 359744
    %81 = vst.msk [vmem:[#allocation0] sm:$0xf] %vm80, %v79
    %s82 = scalar_lea.vmem %s0, 9
    %s83 = smov 3
    %v84 = vld [vmem:[%s82] ss:$16 sm:%s83]
    %s85 = scalar_lea.vmem %s0, 9
    %s86 = smov 12
    %v87 = vld [vmem:[%s85] ss:$16 sm:%s86]
    %vm88 = vcmask 1043458
    %v89 = vsel %vm88, %v87, %v84
    %90 = vrot.lane.b32.xlu0 %v89, 36
    %v91 = vpop.permute.xlu0 %90
    %vm92 = vcmask 326944
    %93 = vst.msk [vmem:[#allocation0] sm:$0xf] %vm92, %v91
    %s94 = scalar_lea.vmem %s0, 8
    %s95 = smov 3
    %v96 = vld [vmem:[%s94] ss:$16 sm:%s95]
    %s97 = scalar_lea.vmem %s0, 8
    %s98 = smov 12
    %v99 = vld [vmem:[%s97] ss:$16 sm:%s98]
    %vm100 = vcmask 1043458
    %v101 = vsel %vm100, %v99, %v96
    %102 = vrot.lane.b32.xlu0 %v101, 32
    %v103 = vpop.permute.xlu0 %102
    %vm104 = vcmask 294144
    %105 = vst.msk [vmem:[#allocation0] sm:$0xf] %vm104, %v103
    %s106 = scalar_lea.vmem %s0, 7
    %s107 = smov 3
    %v108 = vld [vmem:[%s106] ss:$16 sm:%s107]
    %s109 = scalar_lea.vmem %s0, 7
    %s110 = smov 12
    %v111 = vld [vmem:[%s109] ss:$16 sm:%s110]
    %vm112 = vcmask 1043458
    %v113 = vsel %vm112, %v111, %v108
    %114 = vrot.lane.b32.xlu0 %v113, 28
    %v115 = vpop.permute.xlu0 %114
    %vm116 = vcmask 261344
    %117 = vst.msk [vmem:[#allocation0] sm:$0xf] %vm116, %v115
    %s118 = scalar_lea.vmem %s0, 6
    %s119 = smov 3
    %v120 = vld [vmem:[%s118] ss:$16 sm:%s119]
    %s121 = scalar_lea.vmem %s0, 6
    %s122 = smov 12
    %v123 = vld [vmem:[%s121] ss:$16 sm:%s122]
    %vm124 = vcmask 1043458
    %v125 = vsel %vm124, %v123, %v120
    %126 = vrot.lane.b32.xlu0 %v125, 24
    %v127 = vpop.permute.xlu0 %126
    %vm128 = vcmask 228544
    %129 = vst.msk [vmem:[#allocation0] sm:$0xf] %vm128, %v127
    %s130 = scalar_lea.vmem %s0, 5
    %s131 = smov 3
    %v132 = vld [vmem:[%s130] ss:$16 sm:%s131]
    %s133 = scalar_lea.vmem %s0, 5
    %s134 = smov 12
    %v135 = vld [vmem:[%s133] ss:$16 sm:%s134]
    %vm136 = vcmask 1043458
    %v137 = vsel %vm136, %v135, %v132
    %138 = vrot.lane.b32.xlu0 %v137, 20
    %v139 = vpop.permute.xlu0 %138
    %vm140 = vcmask 195744
    %141 = vst.msk [vmem:[#allocation0] sm:$0xf] %vm140, %v139
    %s142 = scalar_lea.vmem %s0, 4
    %s143 = smov 3
    %v144 = vld [vmem:[%s142] ss:$16 sm:%s143]
    %s145 = scalar_lea.vmem %s0, 4
    %s146 = smov 12
    %v147 = vld [vmem:[%s145] ss:$16 sm:%s146]
    %vm148 = vcmask 1043458
    %v149 = vsel %vm148, %v147, %v144
    %150 = vrot.lane.b32.xlu0 %v149, 16
    %v151 = vpop.permute.xlu0 %150
    %vm152 = vcmask 162944
    %153 = vst.msk [vmem:[#allocation0] sm:$0xf] %vm152, %v151
    %s154 = scalar_lea.vmem %s0, 3
    %s155 = smov 3
    %v156 = vld [vmem:[%s154] ss:$16 sm:%s155]
    %s157 = scalar_lea.vmem %s0, 3
    %s158 = smov 12
    %v159 = vld [vmem:[%s157] ss:$16 sm:%s158]
    %vm160 = vcmask 1043458
    %v161 = vsel %vm160, %v159, %v156
    %162 = vrot.lane.b32.xlu0 %v161, 12
    %v163 = vpop.permute.xlu0 %162
    %vm164 = vcmask 130144
    %165 = vst.msk [vmem:[#allocation0] sm:$0xf] %vm164, %v163
    %s166 = scalar_lea.vmem %s0, 2
    %s167 = smov 3
    %v168 = vld [vmem:[%s166] ss:$16 sm:%s167]
    %s169 = scalar_lea.vmem %s0, 2
    %s170 = smov 12
    %v171 = vld [vmem:[%s169] ss:$16 sm:%s170]
    %vm172 = vcmask 1043458
    %v173 = vsel %vm172, %v171, %v168
    %174 = vrot.lane.b32.xlu0 %v173, 8
    %v175 = vpop.permute.xlu0 %174
    %vm176 = vcmask 97344
    %177 = vst.msk [vmem:[#allocation0] sm:$0xf] %vm176, %v175
    %s178 = scalar_lea.vmem %s0, 1
    %s179 = smov 3
    %v180 = vld [vmem:[%s178] ss:$16 sm:%s179]
    %s181 = scalar_lea.vmem %s0, 1
    %s182 = smov 12
    %v183 = vld [vmem:[%s181] ss:$16 sm:%s182]
    %vm184 = vcmask 1043458
    %v185 = vsel %vm184, %v183, %v180
    %186 = vrot.lane.b32.xlu0 %v185, 4
    %v187 = vpop.permute.xlu0 %186
    %vm188 = vcmask 64544
    %189 = vst.msk [vmem:[#allocation0] sm:$0xf] %vm188, %v187
    %s191 = sshllo.u32 0, 4
    %v193 = vld [vmem:[#allocation0] sm:%s191]
    %s194 = sshllo.u32 0, 4
    %195 = vst [vmem:[%s1] sm:%s194] %v193

// kernel: basic_block_forward.1
$region0: #{basic_block_forward.1}
  #allocation0 [shape = 'u32[]', space=smem, size = 0x4, offset = 0x4, fixed_abs, tag = 'smem constant byte address 0x4 - core index']
  #allocation1 [shape = 'u32[144,128]{1,0:T(1,128)}', space=vmem, size = 0x12000, scoped, tag = 'internal scratch']
  #allocation2 [shape = 'f32[2,18,64]{2,1,0:T(8,128)}', space=vmem, size = 0x6000, scoped, tag = 'scratch operand']
  #allocation3 [shape = 'f32[2,18,64]{2,1,0:T(8,128)}', space=vmem, size = 0x6000, scoped, tag = 'scratch operand']
  %s0 = inlined_call_operand.vmem [shape: f32[2,16,64], index: 0, kind: input, shape index: {}]
  %s1 = inlined_call_operand.vmem [shape: bf16[3,64,64], index: 1, kind: input, shape index: {}]
  %s2 = inlined_call_operand.vmem [shape: f32[1,4], index: 2, kind: input, shape index: {}]
  %s3 = inlined_call_operand.vmem [shape: f32[1,4], index: 3, kind: input, shape index: {}]
  %s4 = inlined_call_operand.vmem [shape: bf16[3,64,64], index: 4, kind: input, shape index: {}]
  %s5 = inlined_call_operand.vmem [shape: f32[1,4], index: 5, kind: input, shape index: {}]
  %s6 = inlined_call_operand.vmem [shape: f32[1,4], index: 6, kind: input, shape index: {}]
  %s7 = inlined_call_operand.vmem [shape: f32[64,4], index: 7, kind: input, shape index: {}]
  %s8 = inlined_call_operand.vmem [shape: f32[4,64], index: 8, kind: input, shape index: {}]
  %s9 = inlined_call_operand.vmem [shape: f32[32,64], index: 9, kind: output, shape index: {}]
  %s10 = sld [smem:[#allocation0]]
  $region46: #{basic_block_forward.1} parent=0
    _
  %s12 = ssub.s32 1, %s10
  %s13 = scalar_select 0, %s12, %s10
  // Predicated region
  $region2: #{basic_block_forward.1} parent=0 // pred_check
    _
  $region3: #{basic_block_forward.1} parent=0 // pred_check_branch
    %15 = sbr.rel (0) target = $region5
  $region4: #{basic_block_forward.1} parent=0 // pred_region
    _
  $region5: #{basic_block_forward.1} parent=0 // pred_fallthru
    _
  // Predicated region
  $region6: #{basic_block_forward.1} parent=0 // pred_check
    _
  $region7: #{basic_block_forward.1} parent=0 // pred_check_branch
    %17 = sbr.rel (0) target = $region9
  $region8: #{basic_block_forward.1} parent=0 // pred_region
    _
  $region9: #{basic_block_forward.1} parent=0 // pred_fallthru
    _
  // Predicated region
  $region10: #{basic_block_forward.1} parent=0 // pred_check
    _
  $region11: #{basic_block_forward.1} parent=0 // pred_check_branch
    %19 = sbr.rel (0) target = $region13
  $region12: #{basic_block_forward.1} parent=0 // pred_region
    _
  $region13: #{basic_block_forward.1} parent=0 // pred_fallthru
    _
  // Predicated region
  $region14: #{basic_block_forward.1} parent=0 // pred_check
    _
  $region15: #{basic_block_forward.1} parent=0 // pred_check_branch
    %21 = sbr.rel (0) target = $region17
  $region16: #{basic_block_forward.1} parent=0 // pred_region
    _
  $region17: #{basic_block_forward.1} parent=0 // pred_fallthru
    _
  // Predicated region
  $region18: #{basic_block_forward.1} parent=0 // pred_check
    _
  $region19: #{basic_block_forward.1} parent=0 // pred_check_branch
    %23 = sbr.rel (0) target = $region21
  $region20: #{basic_block_forward.1} parent=0 // pred_region
    _
  $region21: #{basic_block_forward.1} parent=0 // pred_fallthru
    _
  // Predicated region
  $region22: #{basic_block_forward.1} parent=0 // pred_check
    _
  $region23: #{basic_block_forward.1} parent=0 // pred_check_branch
    %25 = sbr.rel (0) target = $region25
  $region24: #{basic_block_forward.1} parent=0 // pred_region
    _
  $region25: #{basic_block_forward.1} parent=0 // pred_fallthru
    _
  // Predicated region
  $region26: #{basic_block_forward.1} parent=0 // pred_check
    _
  $region27: #{basic_block_forward.1} parent=0 // pred_check_branch
    %27 = sbr.rel (0) target = $region29
  $region28: #{basic_block_forward.1} parent=0 // pred_region
    _
  $region29: #{basic_block_forward.1} parent=0 // pred_fallthru
    _
  // Predicated region
  $region30: #{basic_block_forward.1} parent=0 // pred_check
    _
  $region31: #{basic_block_forward.1} parent=0 // pred_check_branch
    %29 = sbr.rel (0) target = $region33
  $region32: #{basic_block_forward.1} parent=0 // pred_region
    _
  $region33: #{basic_block_forward.1} parent=0 // pred_fallthru
    _
  // Predicated region
  $region34: #{basic_block_forward.1} parent=0 // pred_check
    _
  $region35: #{basic_block_forward.1} parent=0 // pred_check_branch
    %31 = sbr.rel (0) target = $region37
  $region36: #{basic_block_forward.1} parent=0 // pred_region
    _
  $region37: #{basic_block_forward.1} parent=0 // pred_fallthru
    _
  %vm33 = vcmask 516096
  %34 = vst.msk [vmem:[#allocation2] sm:$0x1] %vm33, 0.0
  %35 = vst.msk [vmem:[#allocation2 + $0x18] sm:$0x1] %vm33, 0.0
  %36 = vst.msk [vmem:[#allocation2 + $0x11] sm:$0x1] %vm33, 0.0
  %37 = vst.msk [vmem:[#allocation2 + $0x29] sm:$0x1] %vm33, 0.0
  %v38 = vld [vmem:[%s0] sm:$0xff]
  %v39 = vld [vmem:[%s0 + $0x8] sm:$0xff]
  %v40 = vld [vmem:[%s0 + $0x10] sm:$0xff]
  %v41 = vld [vmem:[%s0 + $0x18] sm:$0xff]
  %vm42 = vcmask 523264
  %43 = vst.msk [vmem:[#allocation2 + $0x1] sm:$0xff] %vm42, %v38
  %44 = vst.msk [vmem:[#allocation2 + $0x9] sm:$0xff] %vm42, %v39
  %45 = vst.msk [vmem:[#allocation2 + $0x19] sm:$0xff] %vm42, %v40
  %46 = vst.msk [vmem:[#allocation2 + $0x21] sm:$0xff] %vm42, %v41
  %v47 = vld [vmem:[#allocation2] sm:$0xff]
  %v48 = vld [vmem:[#allocation2 + $0x8] sm:$0xff]
  %v49 = vld [vmem:[#allocation2 + $0x18] sm:$0xff]
  %v50 = vld [vmem:[#allocation2 + $0x20] sm:$0xff]
  %v51 = vpack.c.bf16 %v48, %v47
  %v52 = vpack.c.bf16 %v50, %v49
  %v53 = vld [vmem:[%s1] sm:$0xf]
  %v54 = vld [vmem:[%s1 + $0x4] sm:$0xf]
  %v55 = vld [vmem:[%s1 + $0x8] sm:$0xf]
  %v56 = vld [vmem:[%s1 + $0xc] sm:$0xf]
  %v57 = vld [vmem:[%s1 + $0x10] sm:$0xf]
  %v58 = vld [vmem:[%s1 + $0x14] sm:$0xf]
  %v59 = vld [vmem:[%s1 + $0x18] sm:$0xf]
  %v60 = vld [vmem:[%s1 + $0x1c] sm:$0xf]
  %v61 = vld [vmem:[#allocation2 + $0x1] sm:$0xff]
  %v62 = vld [vmem:[#allocation2 + $0x9] sm:$0xff]
  %v63 = vld [vmem:[#allocation2 + $0x19] sm:$0xff]
  %v64 = vld [vmem:[#allocation2 + $0x21] sm:$0xff]
  %v65 = vpack.c.bf16 %v62, %v61
  %v66 = vpack.c.bf16 %v64, %v63
  %s67 = scalar_lea.vmem %s1, 32
  %v68 = vld [vmem:[%s67] sm:$0xf]
  %v69 = vld [vmem:[%s67 + $0x4] sm:$0xf]
  %v70 = vld [vmem:[%s67 + $0x8] sm:$0xf]
  %v71 = vld [vmem:[%s67 + $0xc] sm:$0xf]
  %v72 = vld [vmem:[%s67 + $0x10] sm:$0xf]
  %v73 = vld [vmem:[%s67 + $0x14] sm:$0xf]
  %v74 = vld [vmem:[%s67 + $0x18] sm:$0xf]
  %v75 = vld [vmem:[%s67 + $0x1c] sm:$0xf]
  %v84 = vunpack.c.l.b16 %v68
  %v85 = vunpack.c.l.b16 %v69
  %v86 = vunpack.c.l.b16 %v70
  %v87 = vunpack.c.l.b16 %v71
  %v88 = vunpack.c.l.b16 %v72
  %v89 = vunpack.c.l.b16 %v73
  %v90 = vunpack.c.l.b16 %v74
  %v91 = vunpack.c.l.b16 %v75
  %v92 = vpack.c.b16 %v85, %v84
  %v93 = vpack.c.b16 %v87, %v86
  %v94 = vpack.c.b16 %v89, %v88
  %v95 = vpack.c.b16 %v91, %v90
  %v101 = vsel %vm42, %v65, 0
  %v104 = vsel %vm42, %v66, 0
  %106 = vmatprep.subr.bf16.mxu0 0
  %107 = vmatpush1.bf16.msra.mxu0 %v92
  %108 = vmatprep.subr.bf16.mxu0 0
  %109 = vmatpush1.bf16.msra.mxu0 %v93
  %110 = vmatprep.subr.bf16.mxu0 0
  %111 = vmatpush1.bf16.msra.mxu0 %v94
  %112 = vmatprep.subr.bf16.mxu0 0
  %113 = vmatpush1.bf16.msra.mxu0 %v95
  %114 = vmatprep.subr.bf16.mxu0 0
  %115 = vmatpush1.bf16.msra.mxu0 0
  %116 = vmatprep.subr.bf16.mxu0 0
  %117 = vmatpush1.bf16.msra.mxu0 0
  %118 = vmatprep.subr.bf16.mxu0 0
  %119 = vmatpush1.bf16.msra.mxu0 0
  %120 = vmatprep.subr.bf16.mxu0 0
  %121 = vmatpush1.bf16.msra.mxu0 0
  %122 = vmatprep.subr.bf16.mxu0 0
  %123 = vmatpush1.bf16.msra.mxu0 0
  %124 = vmatprep.subr.bf16.mxu0 0
  %125 = vmatpush1.bf16.msra.mxu0 0
  %126 = vmatprep.subr.bf16.mxu0 0
  %127 = vmatpush1.bf16.msra.mxu0 0
  %128 = vmatprep.subr.bf16.mxu0 0
  %129 = vmatpush1.bf16.msra.mxu0 0
  %130 = vmatprep.subr.bf16.mxu0 0
  %131 = vmatpush1.bf16.msra.mxu0 0
  %132 = vmatprep.subr.bf16.mxu0 0
  %133 = vmatpush1.bf16.msra.mxu0 0
  %134 = vmatprep.subr.bf16.mxu0 0
  %135 = vmatpush1.bf16.msra.mxu0 0
  %136 = vmatprep.subr.bf16.mxu0 0
  %137 = vmatpush1.bf16.msra.mxu0 0
  %138 = vmatprep.mubr.bf16.mxu0 0
  %139 = vmatmul.mubr.bf16.gmra.mrb[0].mxu0 %v101
  %v140 = vpop.f32.mrb[0].mxu0
  %v141 = vadd.f32 0.0, %v140
  %v142 = vpop.f32.mrb[0].mxu0
  %v143 = vpop.f32.mrb[0].mxu0
  %v144 = vadd.f32 0.0, %v143
  %v145 = vpop.f32.mrb[0].mxu0
  %146 = vmatprep.mubr.bf16.mxu0 0
  %147 = vmatmul.mubr.bf16.gmra.mrb[0].mxu0 %v104
  %v148 = vpop.f32.mrb[0].mxu0
  %v149 = vadd.f32 0.0, %v148
  %v150 = vpop.f32.mrb[0].mxu0
  %v151 = vpop.f32.mrb[0].mxu0
  %v152 = vadd.f32 0.0, %v151
  %v153 = vpop.f32.mrb[0].mxu0
  %154 = vdwg.mxu0
  %v163 = vunpack.c.l.b16 %v53
  %v164 = vunpack.c.l.b16 %v54
  %v165 = vunpack.c.l.b16 %v55
  %v166 = vunpack.c.l.b16 %v56
  %v167 = vunpack.c.l.b16 %v57
  %v168 = vunpack.c.l.b16 %v58
  %v169 = vunpack.c.l.b16 %v59
  %v170 = vunpack.c.l.b16 %v60
  %v171 = vpack.c.b16 %v164, %v163
  %v172 = vpack.c.b16 %v166, %v165
  %v173 = vpack.c.b16 %v168, %v167
  %v174 = vpack.c.b16 %v170, %v169
  %v180 = vsel %vm42, %v51, 0
  %v183 = vsel %vm42, %v52, 0
  %185 = vmatprep.subr.bf16.mxu0 0
  %186 = vmatpush1.bf16.msra.mxu0 %v171
  %187 = vmatprep.subr.bf16.mxu0 0
  %188 = vmatpush1.bf16.msra.mxu0 %v172
  %189 = vmatprep.subr.bf16.mxu0 0
  %190 = vmatpush1.bf16.msra.mxu0 %v173
  %191 = vmatprep.subr.bf16.mxu0 0
  %192 = vmatpush1.bf16.msra.mxu0 %v174
  %193 = vmatprep.subr.bf16.mxu0 0
  %194 = vmatpush1.bf16.msra.mxu0 0
  %195 = vmatprep.subr.bf16.mxu0 0
  %196 = vmatpush1.bf16.msra.mxu0 0
  %197 = vmatprep.subr.bf16.mxu0 0
  %198 = vmatpush1.bf16.msra.mxu0 0
  %199 = vmatprep.subr.bf16.mxu0 0
  %200 = vmatpush1.bf16.msra.mxu0 0
  %201 = vmatprep.subr.bf16.mxu0 0
  %202 = vmatpush1.bf16.msra.mxu0 0
  %203 = vmatprep.subr.bf16.mxu0 0
  %204 = vmatpush1.bf16.msra.mxu0 0
  %205 = vmatprep.subr.bf16.mxu0 0
  %206 = vmatpush1.bf16.msra.mxu0 0
  %207 = vmatprep.subr.bf16.mxu0 0
  %208 = vmatpush1.bf16.msra.mxu0 0
  %209 = vmatprep.subr.bf16.mxu0 0
  %210 = vmatpush1.bf16.msra.mxu0 0
  %211 = vmatprep.subr.bf16.mxu0 0
  %212 = vmatpush1.bf16.msra.mxu0 0
  %213 = vmatprep.subr.bf16.mxu0 0
  %214 = vmatpush1.bf16.msra.mxu0 0
  %215 = vmatprep.subr.bf16.mxu0 0
  %216 = vmatpush1.bf16.msra.mxu0 0
  %217 = vmatprep.mubr.bf16.mxu0 0
  %218 = vmatmul.mubr.bf16.gmra.mrb[0].mxu0 %v180
  %v219 = vpop.f32.mrb[0].mxu0
  %v220 = vadd.f32 %v141, %v219
  %v221 = vpop.f32.mrb[0].mxu0
  %v222 = vpop.f32.mrb[0].mxu0
  %v223 = vadd.f32 %v144, %v222
  %v224 = vpop.f32.mrb[0].mxu0
  %225 = vmatprep.mubr.bf16.mxu0 0
  %226 = vmatmul.mubr.bf16.gmra.mrb[0].mxu0 %v183
  %v227 = vpop.f32.mrb[0].mxu0
  %v228 = vadd.f32 %v149, %v227
  %v229 = vpop.f32.mrb[0].mxu0
  %v230 = vpop.f32.mrb[0].mxu0
  %v231 = vadd.f32 %v152, %v230
  %v232 = vpop.f32.mrb[0].mxu0
  %233 = vdwg.mxu0
  %v234 = vld [vmem:[#allocation2 + $0x2] sm:$0xff]
  %v235 = vld [vmem:[#allocation2 + $0xa] sm:$0xff]
  %v236 = vld [vmem:[#allocation2 + $0x1a] sm:$0xff]
  %v237 = vld [vmem:[#allocation2 + $0x22] sm:$0xff]
  %v238 = vpack.c.bf16 %v235, %v234
  %v239 = vpack.c.bf16 %v237, %v236
  %s240 = scalar_lea.vmem %s1, 64
  %v241 = vld [vmem:[%s240] sm:$0xf]
  %v242 = vld [vmem:[%s240 + $0x4] sm:$0xf]
  %v243 = vld [vmem:[%s240 + $0x8] sm:$0xf]
  %v244 = vld [vmem:[%s240 + $0xc] sm:$0xf]
  %v245 = vld [vmem:[%s240 + $0x10] sm:$0xf]
  %v246 = vld [vmem:[%s240 + $0x14] sm:$0xf]
  %v247 = vld [vmem:[%s240 + $0x18] sm:$0xf]
  %v248 = vld [vmem:[%s240 + $0x1c] sm:$0xf]
  %v257 = vunpack.c.l.b16 %v241
  %v258 = vunpack.c.l.b16 %v242
  %v259 = vunpack.c.l.b16 %v243
  %v260 = vunpack.c.l.b16 %v244
  %v261 = vunpack.c.l.b16 %v245
  %v262 = vunpack.c.l.b16 %v246
  %v263 = vunpack.c.l.b16 %v247
  %v264 = vunpack.c.l.b16 %v248
  %v265 = vpack.c.b16 %v258, %v257
  %v266 = vpack.c.b16 %v260, %v259
  %v267 = vpack.c.b16 %v262, %v261
  %v268 = vpack.c.b16 %v264, %v263
  %v274 = vsel %vm42, %v238, 0
  %v277 = vsel %vm42, %v239, 0
  %279 = vmatprep.subr.bf16.mxu0 0
  %280 = vmatpush1.bf16.msra.mxu0 %v265
  %281 = vmatprep.subr.bf16.mxu0 0
  %282 = vmatpush1.bf16.msra.mxu0 %v266
  %283 = vmatprep.subr.bf16.mxu0 0
  %284 = vmatpush1.bf16.msra.mxu0 %v267
  %285 = vmatprep.subr.bf16.mxu0 0
  %286 = vmatpush1.bf16.msra.mxu0 %v268
  %287 = vmatprep.subr.bf16.mxu0 0
  %288 = vmatpush1.bf16.msra.mxu0 0
  %289 = vmatprep.subr.bf16.mxu0 0
  %290 = vmatpush1.bf16.msra.mxu0 0
  %291 = vmatprep.subr.bf16.mxu0 0
  %292 = vmatpush1.bf16.msra.mxu0 0
  %293 = vmatprep.subr.bf16.mxu0 0
  %294 = vmatpush1.bf16.msra.mxu0 0
  %295 = vmatprep.subr.bf16.mxu0 0
  %296 = vmatpush1.bf16.msra.mxu0 0
  %297 = vmatprep.subr.bf16.mxu0 0
  %298 = vmatpush1.bf16.msra.mxu0 0
  %299 = vmatprep.subr.bf16.mxu0 0
  %300 = vmatpush1.bf16.msra.mxu0 0
  %301 = vmatprep.subr.bf16.mxu0 0
  %302 = vmatpush1.bf16.msra.mxu0 0
  %303 = vmatprep.subr.bf16.mxu0 0
  %304 = vmatpush1.bf16.msra.mxu0 0
  %305 = vmatprep.subr.bf16.mxu0 0
  %306 = vmatpush1.bf16.msra.mxu0 0
  %307 = vmatprep.subr.bf16.mxu0 0
  %308 = vmatpush1.bf16.msra.mxu0 0
  %309 = vmatprep.subr.bf16.mxu0 0
  %310 = vmatpush1.bf16.msra.mxu0 0
  %311 = vmatprep.mubr.bf16.mxu0 0
  %312 = vmatmul.mubr.bf16.gmra.mrb[0].mxu0 %v274
  %v313 = vpop.f32.mrb[0].mxu0
  %v314 = vadd.f32 0.0, %v313
  %v315 = vpop.f32.mrb[0].mxu0
  %v316 = vpop.f32.mrb[0].mxu0
  %v317 = vadd.f32 0.0, %v316
  %v318 = vpop.f32.mrb[0].mxu0
  %319 = vmatprep.mubr.bf16.mxu0 0
  %320 = vmatmul.mubr.bf16.gmra.mrb[0].mxu0 %v277
  %v321 = vpop.f32.mrb[0].mxu0
  %v322 = vadd.f32 0.0, %v321
  %v323 = vpop.f32.mrb[0].mxu0
  %v324 = vpop.f32.mrb[0].mxu0
  %v325 = vadd.f32 0.0, %v324
  %v326 = vpop.f32.mrb[0].mxu0
  %327 = vdwg.mxu0
  %v328 = vadd.f32 %v220, %v314
  %v329 = vadd.f32 %v223, %v317
  %v330 = vadd.f32 %v228, %v322
  %v331 = vadd.f32 %v231, %v325
  %v332 = vld [vmem:[%s2] sm:$0x1]
  %v333 = vld [vmem:[%s3] sm:$0x1]
  %v334 = vsel %vm42, %v328, 0.0
  %v335 = vsel %vm42, %v329, 0.0
  %v336 = vadd.f32 %v334, %v335
  %v337 = vsel %vm42, %v330, 0.0
  %v338 = vadd.f32 %v336, %v337
  %v339 = vsel %vm42, %v331, 0.0
  %v340 = vadd.f32 %v338, %v339
  %v341 = vrot.slane %v340, 4
  %v342 = vadd.f32 %v340, %v341
  %v343 = vrot.slane %v342, 2
  %v344 = vadd.f32 %v342, %v343
  %v345 = vrot.slane %v344, 1
  %v346 = vadd.f32 %v344, %v345
  %v347 = vmul.f32 %v328, %v328
  %v348 = vmul.f32 %v329, %v329
  %v349 = vmul.f32 %v330, %v330
  %v350 = vmul.f32 %v331, %v331
  %v351 = vsel %vm42, %v347, 0.0
  %v352 = vsel %vm42, %v348, 0.0
  %v353 = vadd.f32 %v351, %v352
  %v354 = vsel %vm42, %v349, 0.0
  %v355 = vadd.f32 %v353, %v354
  %v356 = vsel %vm42, %v350, 0.0
  %v357 = vadd.f32 %v355, %v356
  %v358 = vrot.slane %v357, 4
  %v359 = vadd.f32 %v357, %v358
  %v360 = vrot.slane %v359, 2
  %v361 = vadd.f32 %v359, %v360
  %v362 = vrot.slane %v361, 1
  %v363 = vadd.f32 %v361, %v362
  %v364 = vld [vmem:[%s7] sm:$0xff]
  %v365 = vld [vmem:[%s7 + $0x8] sm:$0xff]
  %v366 = vld [vmem:[%s7 + $0x10] sm:$0xff]
  %v367 = vld [vmem:[%s7 + $0x18] sm:$0xff]
  %v368 = vld [vmem:[%s7 + $0x20] sm:$0xff]
  %v369 = vld [vmem:[%s7 + $0x28] sm:$0xff]
  %v370 = vld [vmem:[%s7 + $0x30] sm:$0xff]
  %v371 = vld [vmem:[%s7 + $0x38] sm:$0xff]
  %v373 = vsel %vm42, %v346, 0
  %375 = vmatprep.subr.mxu0 0.0
  %376 = vmatpush1.msra.mxu0 %v364
  %377 = vmatprep.subr.mxu0 0.0
  %378 = vmatpush1.msra.mxu0 %v365
  %379 = vmatprep.subr.mxu0 0.0
  %380 = vmatpush1.msra.mxu0 %v366
  %381 = vmatprep.subr.mxu0 0.0
  %382 = vmatpush1.msra.mxu0 %v367
  %383 = vmatprep.subr.mxu0 0.0
  %384 = vmatpush1.msra.mxu0 %v368
  %385 = vmatprep.subr.mxu0 0.0
  %386 = vmatpush1.msra.mxu0 %v369
  %387 = vmatprep.subr.mxu0 0.0
  %388 = vmatpush1.msra.mxu0 %v370
  %389 = vmatprep.subr.mxu0 0.0
  %390 = vmatpush1.msra.mxu0 %v371
  %391 = vmatprep.subr.mxu0 0.0
  %392 = vmatpush1.msra.mxu0 0.0
  %393 = vmatprep.subr.mxu0 0.0
  %394 = vmatpush1.msra.mxu0 0.0
  %395 = vmatprep.subr.mxu0 0.0
  %396 = vmatpush1.msra.mxu0 0.0
  %397 = vmatprep.subr.mxu0 0.0
  %398 = vmatpush1.msra.mxu0 0.0
  %399 = vmatprep.subr.mxu0 0.0
  %400 = vmatpush1.msra.mxu0 0.0
  %401 = vmatprep.subr.mxu0 0.0
  %402 = vmatpush1.msra.mxu0 0.0
  %403 = vmatprep.subr.mxu0 0.0
  %404 = vmatpush1.msra.mxu0 0.0
  %405 = vmatprep.subr.mxu0 0.0
  %406 = vmatpush1.msra.mxu0 0.0
  %407 = vmatprep.subr.mxu0 0.0
  %408 = vmatpush1.msra.mxu0 0.0
  %409 = vmatprep.subr.mxu0 0.0
  %410 = vmatpush1.msra.mxu0 0.0
  %411 = vmatprep.subr.mxu0 0.0
  %412 = vmatpush1.msra.mxu0 0.0
  %413 = vmatprep.subr.mxu0 0.0
  %414 = vmatpush1.msra.mxu0 0.0
  %415 = vmatprep.subr.mxu0 0.0
  %416 = vmatpush1.msra.mxu0 0.0
  %417 = vmatprep.subr.mxu0 0.0
  %418 = vmatpush1.msra.mxu0 0.0
  %419 = vmatprep.subr.mxu0 0.0
  %420 = vmatpush1.msra.mxu0 0.0
  %421 = vmatprep.subr.mxu0 0.0
  %422 = vmatpush1.msra.mxu0 0.0
  %423 = vmatprep.subr.mxu0 0.0
  %424 = vmatpush1.msra.mxu0 0.0
  %425 = vmatprep.subr.mxu0 0.0
  %426 = vmatpush1.msra.mxu0 0.0
  %427 = vmatprep.subr.mxu0 0.0
  %428 = vmatpush1.msra.mxu0 0.0
  %429 = vmatprep.subr.mxu0 0.0
  %430 = vmatpush1.msra.mxu0 0.0
  %431 = vmatprep.subr.mxu0 0.0
  %432 = vmatpush1.msra.mxu0 0.0
  %433 = vmatprep.subr.mxu0 0.0
  %434 = vmatpush1.msra.mxu0 0.0
  %435 = vmatprep.subr.mxu0 0.0
  %436 = vmatpush1.msra.mxu0 0.0
  %437 = vmatprep.subr.mxu0 0.0
  %438 = vmatpush1.msra.mxu0 0.0
  %439 = vmatprep.mubr.f32.mxu0 0.0
  %440 = vmatmul.mubr.f32.gmra.mrb[0].mxu0 %v373
  %v441 = vpop.f32.mrb[0].mxu0
  %v442 = vadd.f32 0.0, %v441
  %v443 = vpop.f32.mrb[0].mxu0
  %444 = vdwg.mxu0
  %v446 = vsel %vm42, %v363, 0
  %448 = vmatprep.subr.mxu0 0.0
  %449 = vmatpush1.msra.mxu0 %v364
  %450 = vmatprep.subr.mxu0 0.0
  %451 = vmatpush1.msra.mxu0 %v365
  %452 = vmatprep.subr.mxu0 0.0
  %453 = vmatpush1.msra.mxu0 %v366
  %454 = vmatprep.subr.mxu0 0.0
  %455 = vmatpush1.msra.mxu0 %v367
  %456 = vmatprep.subr.mxu0 0.0
  %457 = vmatpush1.msra.mxu0 %v368
  %458 = vmatprep.subr.mxu0 0.0
  %459 = vmatpush1.msra.mxu0 %v369
  %460 = vmatprep.subr.mxu0 0.0
  %461 = vmatpush1.msra.mxu0 %v370
  %462 = vmatprep.subr.mxu0 0.0
  %463 = vmatpush1.msra.mxu0 %v371
  %464 = vmatprep.subr.mxu0 0.0
  %465 = vmatpush1.msra.mxu0 0.0
  %466 = vmatprep.subr.mxu0 0.0
  %467 = vmatpush1.msra.mxu0 0.0
  %468 = vmatprep.subr.mxu0 0.0
  %469 = vmatpush1.msra.mxu0 0.0
  %470 = vmatprep.subr.mxu0 0.0
  %471 = vmatpush1.msra.mxu0 0.0
  %472 = vmatprep.subr.mxu0 0.0
  %473 = vmatpush1.msra.mxu0 0.0
  %474 = vmatprep.subr.mxu0 0.0
  %475 = vmatpush1.msra.mxu0 0.0
  %476 = vmatprep.subr.mxu0 0.0
  %477 = vmatpush1.msra.mxu0 0.0
  %478 = vmatprep.subr.mxu0 0.0
  %479 = vmatpush1.msra.mxu0 0.0
  %480 = vmatprep.subr.mxu0 0.0
  %481 = vmatpush1.msra.mxu0 0.0
  %482 = vmatprep.subr.mxu0 0.0
  %483 = vmatpush1.msra.mxu0 0.0
  %484 = vmatprep.subr.mxu0 0.0
  %485 = vmatpush1.msra.mxu0 0.0
  %486 = vmatprep.subr.mxu0 0.0
  %487 = vmatpush1.msra.mxu0 0.0
  %488 = vmatprep.subr.mxu0 0.0
  %489 = vmatpush1.msra.mxu0 0.0
  %490 = vmatprep.subr.mxu0 0.0
  %491 = vmatpush1.msra.mxu0 0.0
  %492 = vmatprep.subr.mxu0 0.0
  %493 = vmatpush1.msra.mxu0 0.0
  %494 = vmatprep.subr.mxu0 0.0
  %495 = vmatpush1.msra.mxu0 0.0
  %496 = vmatprep.subr.mxu0 0.0
  %497 = vmatpush1.msra.mxu0 0.0
  %498 = vmatprep.subr.mxu0 0.0
  %499 = vmatpush1.msra.mxu0 0.0
  %500 = vmatprep.subr.mxu0 0.0
  %501 = vmatpush1.msra.mxu0 0.0
  %502 = vmatprep.subr.mxu0 0.0
  %503 = vmatpush1.msra.mxu0 0.0
  %504 = vmatprep.subr.mxu0 0.0
  %505 = vmatpush1.msra.mxu0 0.0
  %506 = vmatprep.subr.mxu0 0.0
  %507 = vmatpush1.msra.mxu0 0.0
  %508 = vmatprep.subr.mxu0 0.0
  %509 = vmatpush1.msra.mxu0 0.0
  %510 = vmatprep.subr.mxu0 0.0
  %511 = vmatpush1.msra.mxu0 0.0
  %512 = vmatprep.mubr.f32.mxu0 0.0
  %513 = vmatmul.mubr.f32.gmra.mrb[0].mxu0 %v446
  %v514 = vpop.f32.mrb[0].mxu0
  %v515 = vadd.f32 0.0, %v514
  %v516 = vpop.f32.mrb[0].mxu0
  %517 = vdwg.mxu0
  %v518 = vrcp.pop 512.0
  %v519 = vmul.f32 %v442, %v518
  %v520 = vmul.f32 %v515, %v518
  %v521 = vmul.f32 %v519, %v519
  %v522 = vsub.f32 %v520, %v521
  %v523 = vadd.f32 %v522, 1e-05
  %v524 = vrsqrt.pop %v523
  %v525 = vmul.f32 %v332, %v524
  %v526 = vmul.f32 %v519, %v525
  %v527 = vsub.f32 %v333, %v526
  %v528 = vld [vmem:[%s8] sm:$0xf]
  %vm529 = vcmask 31744
  %v531 = vsel %vm529, %v525, 0
  %vm533 = vcmask 1043456
  %v535 = vsel %vm533, %v528, 0
  %537 = vmatprep.subr.mxu0 0.0
  %538 = vmatpush1.msra.mxu0 %v535
  %539 = vmatprep.subr.mxu0 0.0
  %540 = vmatpush1.msra.mxu0 0.0
  %541 = vmatprep.subr.mxu0 0.0
  %542 = vmatpush1.msra.mxu0 0.0
  %543 = vmatprep.subr.mxu0 0.0
  %544 = vmatpush1.msra.mxu0 0.0
  %545 = vmatprep.subr.mxu0 0.0
  %546 = vmatpush1.msra.mxu0 0.0
  %547 = vmatprep.subr.mxu0 0.0
  %548 = vmatpush1.msra.mxu0 0.0
  %549 = vmatprep.subr.mxu0 0.0
  %550 = vmatpush1.msra.mxu0 0.0
  %551 = vmatprep.subr.mxu0 0.0
  %552 = vmatpush1.msra.mxu0 0.0
  %553 = vmatprep.subr.mxu0 0.0
  %554 = vmatpush1.msra.mxu0 0.0
  %555 = vmatprep.subr.mxu0 0.0
  %556 = vmatpush1.msra.mxu0 0.0
  %557 = vmatprep.subr.mxu0 0.0
  %558 = vmatpush1.msra.mxu0 0.0
  %559 = vmatprep.subr.mxu0 0.0
  %560 = vmatpush1.msra.mxu0 0.0
  %561 = vmatprep.subr.mxu0 0.0
  %562 = vmatpush1.msra.mxu0 0.0
  %563 = vmatprep.subr.mxu0 0.0
  %564 = vmatpush1.msra.mxu0 0.0
  %565 = vmatprep.subr.mxu0 0.0
  %566 = vmatpush1.msra.mxu0 0.0
  %567 = vmatprep.subr.mxu0 0.0
  %568 = vmatpush1.msra.mxu0 0.0
  %569 = vmatprep.subr.mxu0 0.0
  %570 = vmatpush1.msra.mxu0 0.0
  %571 = vmatprep.subr.mxu0 0.0
  %572 = vmatpush1.msra.mxu0 0.0
  %573 = vmatprep.subr.mxu0 0.0
  %574 = vmatpush1.msra.mxu0 0.0
  %575 = vmatprep.subr.mxu0 0.0
  %576 = vmatpush1.msra.mxu0 0.0
  %577 = vmatprep.subr.mxu0 0.0
  %578 = vmatpush1.msra.mxu0 0.0
  %579 = vmatprep.subr.mxu0 0.0
  %580 = vmatpush1.msra.mxu0 0.0
  %581 = vmatprep.subr.mxu0 0.0
  %582 = vmatpush1.msra.mxu0 0.0
  %583 = vmatprep.subr.mxu0 0.0
  %584 = vmatpush1.msra.mxu0 0.0
  %585 = vmatprep.subr.mxu0 0.0
  %586 = vmatpush1.msra.mxu0 0.0
  %587 = vmatprep.subr.mxu0 0.0
  %588 = vmatpush1.msra.mxu0 0.0
  %589 = vmatprep.subr.mxu0 0.0
  %590 = vmatpush1.msra.mxu0 0.0
  %591 = vmatprep.subr.mxu0 0.0
  %592 = vmatpush1.msra.mxu0 0.0
  %593 = vmatprep.subr.mxu0 0.0
  %594 = vmatpush1.msra.mxu0 0.0
  %595 = vmatprep.subr.mxu0 0.0
  %596 = vmatpush1.msra.mxu0 0.0
  %597 = vmatprep.subr.mxu0 0.0
  %598 = vmatpush1.msra.mxu0 0.0
  %599 = vmatprep.subr.mxu0 0.0
  %600 = vmatpush1.msra.mxu0 0.0
  %601 = vmatprep.mubr.f32.mxu0 0.0
  %602 = vmatmul.mubr.f32.gmra.mrb[0].mxu0 %v531
  %v603 = vpop.f32.mrb[0].mxu0
  %v604 = vadd.f32 0.0, %v603
  %v605 = vpop.f32.mrb[0].mxu0
  %606 = vdwg.mxu0
  %v608 = vsel %vm529, %v527, 0
  %610 = vmatprep.subr.mxu0 0.0
  %611 = vmatpush1.msra.mxu0 %v535
  %612 = vmatprep.subr.mxu0 0.0
  %613 = vmatpush1.msra.mxu0 0.0
  %614 = vmatprep.subr.mxu0 0.0
  %615 = vmatpush1.msra.mxu0 0.0
  %616 = vmatprep.subr.mxu0 0.0
  %617 = vmatpush1.msra.mxu0 0.0
  %618 = vmatprep.subr.mxu0 0.0
  %619 = vmatpush1.msra.mxu0 0.0
  %620 = vmatprep.subr.mxu0 0.0
  %621 = vmatpush1.msra.mxu0 0.0
  %622 = vmatprep.subr.mxu0 0.0
  %623 = vmatpush1.msra.mxu0 0.0
  %624 = vmatprep.subr.mxu0 0.0
  %625 = vmatpush1.msra.mxu0 0.0
  %626 = vmatprep.subr.mxu0 0.0
  %627 = vmatpush1.msra.mxu0 0.0
  %628 = vmatprep.subr.mxu0 0.0
  %629 = vmatpush1.msra.mxu0 0.0
  %630 = vmatprep.subr.mxu0 0.0
  %631 = vmatpush1.msra.mxu0 0.0
  %632 = vmatprep.subr.mxu0 0.0
  %633 = vmatpush1.msra.mxu0 0.0
  %634 = vmatprep.subr.mxu0 0.0
  %635 = vmatpush1.msra.mxu0 0.0
  %636 = vmatprep.subr.mxu0 0.0
  %637 = vmatpush1.msra.mxu0 0.0
  %638 = vmatprep.subr.mxu0 0.0
  %639 = vmatpush1.msra.mxu0 0.0
  %640 = vmatprep.subr.mxu0 0.0
  %641 = vmatpush1.msra.mxu0 0.0
  %642 = vmatprep.subr.mxu0 0.0
  %643 = vmatpush1.msra.mxu0 0.0
  %644 = vmatprep.subr.mxu0 0.0
  %645 = vmatpush1.msra.mxu0 0.0
  %646 = vmatprep.subr.mxu0 0.0
  %647 = vmatpush1.msra.mxu0 0.0
  %648 = vmatprep.subr.mxu0 0.0
  %649 = vmatpush1.msra.mxu0 0.0
  %650 = vmatprep.subr.mxu0 0.0
  %651 = vmatpush1.msra.mxu0 0.0
  %652 = vmatprep.subr.mxu0 0.0
  %653 = vmatpush1.msra.mxu0 0.0
  %654 = vmatprep.subr.mxu0 0.0
  %655 = vmatpush1.msra.mxu0 0.0
  %656 = vmatprep.subr.mxu0 0.0
  %657 = vmatpush1.msra.mxu0 0.0
  %658 = vmatprep.subr.mxu0 0.0
  %659 = vmatpush1.msra.mxu0 0.0
  %660 = vmatprep.subr.mxu0 0.0
  %661 = vmatpush1.msra.mxu0 0.0
  %662 = vmatprep.subr.mxu0 0.0
  %663 = vmatpush1.msra.mxu0 0.0
  %664 = vmatprep.subr.mxu0 0.0
  %665 = vmatpush1.msra.mxu0 0.0
  %666 = vmatprep.subr.mxu0 0.0
  %667 = vmatpush1.msra.mxu0 0.0
  %668 = vmatprep.subr.mxu0 0.0
  %669 = vmatpush1.msra.mxu0 0.0
  %670 = vmatprep.subr.mxu0 0.0
  %671 = vmatpush1.msra.mxu0 0.0
  %672 = vmatprep.subr.mxu0 0.0
  %673 = vmatpush1.msra.mxu0 0.0
  %674 = vmatprep.mubr.f32.mxu0 0.0
  %675 = vmatmul.mubr.f32.gmra.mrb[0].mxu0 %v608
  %v676 = vpop.f32.mrb[0].mxu0
  %v677 = vadd.f32 0.0, %v676
  %v678 = vpop.f32.mrb[0].mxu0
  %679 = vdwg.mxu0
  %v680 = vlaneseq
  %v681 = vshrl.u32 %v680, 7
  %v682 = vsub.s32 0, %v681
  %v683 = vrot.slane %v604, %v682
  %v684 = vmul.f32 %v328, %v683
  %v685 = vmul.f32 %v329, %v683
  %v686 = vmul.f32 %v330, %v683
  %v687 = vmul.f32 %v331, %v683
  %v688 = vlaneseq
  %v689 = vshrl.u32 %v688, 7
  %v690 = vsub.s32 0, %v689
  %v691 = vrot.slane %v677, %v690
  %v692 = vadd.f32 %v684, %v691
  %v693 = vadd.f32 %v685, %v691
  %v694 = vadd.f32 %v686, %v691
  %v695 = vadd.f32 %v687, %v691
  %v696 = vmax.f32 %v692, 0.0
  %v697 = vmax.f32 %v693, 0.0
  %v698 = vmax.f32 %v694, 0.0
  %v699 = vmax.f32 %v695, 0.0
  %700 = vst.msk [vmem:[#allocation3] sm:$0x1] %vm33, 0.0
  %701 = vst.msk [vmem:[#allocation3 + $0x18] sm:$0x1] %vm33, 0.0
  %702 = vst.msk [vmem:[#allocation3 + $0x11] sm:$0x1] %vm33, 0.0
  %703 = vst.msk [vmem:[#allocation3 + $0x29] sm:$0x1] %vm33, 0.0
  %704 = vst.msk [vmem:[#allocation3 + $0x1] sm:$0xff] %vm42, %v696
  %705 = vst.msk [vmem:[#allocation3 + $0x9] sm:$0xff] %vm42, %v697
  %706 = vst.msk [vmem:[#allocation3 + $0x19] sm:$0xff] %vm42, %v698
  %707 = vst.msk [vmem:[#allocation3 + $0x21] sm:$0xff] %vm42, %v699
  %v708 = vld [vmem:[#allocation3] sm:$0xff]
  %v709 = vld [vmem:[#allocation3 + $0x8] sm:$0xff]
  %v710 = vld [vmem:[#allocation3 + $0x18] sm:$0xff]
  %v711 = vld [vmem:[#allocation3 + $0x20] sm:$0xff]
  %v712 = vpack.c.bf16 %v709, %v708
  %v713 = vpack.c.bf16 %v711, %v710
  %v714 = vld [vmem:[%s4] sm:$0xf]
  %v715 = vld [vmem:[%s4 + $0x4] sm:$0xf]
  %v716 = vld [vmem:[%s4 + $0x8] sm:$0xf]
  %v717 = vld [vmem:[%s4 + $0xc] sm:$0xf]
  %v718 = vld [vmem:[%s4 + $0x10] sm:$0xf]
  %v719 = vld [vmem:[%s4 + $0x14] sm:$0xf]
  %v720 = vld [vmem:[%s4 + $0x18] sm:$0xf]
  %v721 = vld [vmem:[%s4 + $0x1c] sm:$0xf]
  %v722 = vld [vmem:[#allocation3 + $0x1] sm:$0xff]
  %v723 = vld [vmem:[#allocation3 + $0x9] sm:$0xff]
  %v724 = vld [vmem:[#allocation3 + $0x19] sm:$0xff]
  %v725 = vld [vmem:[#allocation3 + $0x21] sm:$0xff]
  %v726 = vpack.c.bf16 %v723, %v722
  %v727 = vpack.c.bf16 %v725, %v724
  %s728 = scalar_lea.vmem %s4, 32
  %v729 = vld [vmem:[%s728] sm:$0xf]
  %v730 = vld [vmem:[%s728 + $0x4] sm:$0xf]
  %v731 = vld [vmem:[%s728 + $0x8] sm:$0xf]
  %v732 = vld [vmem:[%s728 + $0xc] sm:$0xf]
  %v733 = vld [vmem:[%s728 + $0x10] sm:$0xf]
  %v734 = vld [vmem:[%s728 + $0x14] sm:$0xf]
  %v735 = vld [vmem:[%s728 + $0x18] sm:$0xf]
  %v736 = vld [vmem:[%s728 + $0x1c] sm:$0xf]
  %v745 = vunpack.c.l.b16 %v729
  %v746 = vunpack.c.l.b16 %v730
  %v747 = vunpack.c.l.b16 %v731
  %v748 = vunpack.c.l.b16 %v732
  %v749 = vunpack.c.l.b16 %v733
  %v750 = vunpack.c.l.b16 %v734
  %v751 = vunpack.c.l.b16 %v735
  %v752 = vunpack.c.l.b16 %v736
  %v753 = vpack.c.b16 %v746, %v745
  %v754 = vpack.c.b16 %v748, %v747
  %v755 = vpack.c.b16 %v750, %v749
  %v756 = vpack.c.b16 %v752, %v751
  %v762 = vsel %vm42, %v726, 0
  %v765 = vsel %vm42, %v727, 0
  %767 = vmatprep.subr.bf16.mxu0 0
  %768 = vmatpush1.bf16.msra.mxu0 %v753
  %769 = vmatprep.subr.bf16.mxu0 0
  %770 = vmatpush1.bf16.msra.mxu0 %v754
  %771 = vmatprep.subr.bf16.mxu0 0
  %772 = vmatpush1.bf16.msra.mxu0 %v755
  %773 = vmatprep.subr.bf16.mxu0 0
  %774 = vmatpush1.bf16.msra.mxu0 %v756
  %775 = vmatprep.subr.bf16.mxu0 0
  %776 = vmatpush1.bf16.msra.mxu0 0
  %777 = vmatprep.subr.bf16.mxu0 0
  %778 = vmatpush1.bf16.msra.mxu0 0
  %779 = vmatprep.subr.bf16.mxu0 0
  %780 = vmatpush1.bf16.msra.mxu0 0
  %781 = vmatprep.subr.bf16.mxu0 0
  %782 = vmatpush1.bf16.msra.mxu0 0
  %783 = vmatprep.subr.bf16.mxu0 0
  %784 = vmatpush1.bf16.msra.mxu0 0
  %785 = vmatprep.subr.bf16.mxu0 0
  %786 = vmatpush1.bf16.msra.mxu0 0
  %787 = vmatprep.subr.bf16.mxu0 0
  %788 = vmatpush1.bf16.msra.mxu0 0
  %789 = vmatprep.subr.bf16.mxu0 0
  %790 = vmatpush1.bf16.msra.mxu0 0
  %791 = vmatprep.subr.bf16.mxu0 0
  %792 = vmatpush1.bf16.msra.mxu0 0
  %793 = vmatprep.subr.bf16.mxu0 0
  %794 = vmatpush1.bf16.msra.mxu0 0
  %795 = vmatprep.subr.bf16.mxu0 0
  %796 = vmatpush1.bf16.msra.mxu0 0
  %797 = vmatprep.subr.bf16.mxu0 0
  %798 = vmatpush1.bf16.msra.mxu0 0
  %799 = vmatprep.mubr.bf16.mxu0 0
  %800 = vmatmul.mubr.bf16.gmra.mrb[0].mxu0 %v762
  %v801 = vpop.f32.mrb[0].mxu0
  %v802 = vadd.f32 0.0, %v801
  %v803 = vpop.f32.mrb[0].mxu0
  %v804 = vpop.f32.mrb[0].mxu0
  %v805 = vadd.f32 0.0, %v804
  %v806 = vpop.f32.mrb[0].mxu0
  %807 = vmatprep.mubr.bf16.mxu0 0
  %808 = vmatmul.mubr.bf16.gmra.mrb[0].mxu0 %v765
  %v809 = vpop.f32.mrb[0].mxu0
  %v810 = vadd.f32 0.0, %v809
  %v811 = vpop.f32.mrb[0].mxu0
  %v812 = vpop.f32.mrb[0].mxu0
  %v813 = vadd.f32 0.0, %v812
  %v814 = vpop.f32.mrb[0].mxu0
  %815 = vdwg.mxu0
  %v824 = vunpack.c.l.b16 %v714
  %v825 = vunpack.c.l.b16 %v715
  %v826 = vunpack.c.l.b16 %v716
  %v827 = vunpack.c.l.b16 %v717
  %v828 = vunpack.c.l.b16 %v718
  %v829 = vunpack.c.l.b16 %v719
  %v830 = vunpack.c.l.b16 %v720
  %v831 = vunpack.c.l.b16 %v721
  %v832 = vpack.c.b16 %v825, %v824
  %v833 = vpack.c.b16 %v827, %v826
  %v834 = vpack.c.b16 %v829, %v828
  %v835 = vpack.c.b16 %v831, %v830
  %v841 = vsel %vm42, %v712, 0
  %v844 = vsel %vm42, %v713, 0
  %846 = vmatprep.subr.bf16.mxu0 0
  %847 = vmatpush1.bf16.msra.mxu0 %v832
  %848 = vmatprep.subr.bf16.mxu0 0
  %849 = vmatpush1.bf16.msra.mxu0 %v833
  %850 = vmatprep.subr.bf16.mxu0 0
  %851 = vmatpush1.bf16.msra.mxu0 %v834
  %852 = vmatprep.subr.bf16.mxu0 0
  %853 = vmatpush1.bf16.msra.mxu0 %v835
  %854 = vmatprep.subr.bf16.mxu0 0
  %855 = vmatpush1.bf16.msra.mxu0 0
  %856 = vmatprep.subr.bf16.mxu0 0
  %857 = vmatpush1.bf16.msra.mxu0 0
  %858 = vmatprep.subr.bf16.mxu0 0
  %859 = vmatpush1.bf16.msra.mxu0 0
  %860 = vmatprep.subr.bf16.mxu0 0
  %861 = vmatpush1.bf16.msra.mxu0 0
  %862 = vmatprep.subr.bf16.mxu0 0
  %863 = vmatpush1.bf16.msra.mxu0 0
  %864 = vmatprep.subr.bf16.mxu0 0
  %865 = vmatpush1.bf16.msra.mxu0 0
  %866 = vmatprep.subr.bf16.mxu0 0
  %867 = vmatpush1.bf16.msra.mxu0 0
  %868 = vmatprep.subr.bf16.mxu0 0
  %869 = vmatpush1.bf16.msra.mxu0 0
  %870 = vmatprep.subr.bf16.mxu0 0
  %871 = vmatpush1.bf16.msra.mxu0 0
  %872 = vmatprep.subr.bf16.mxu0 0
  %873 = vmatpush1.bf16.msra.mxu0 0
  %874 = vmatprep.subr.bf16.mxu0 0
  %875 = vmatpush1.bf16.msra.mxu0 0
  %876 = vmatprep.subr.bf16.mxu0 0
  %877 = vmatpush1.bf16.msra.mxu0 0
  %878 = vmatprep.mubr.bf16.mxu0 0
  %879 = vmatmul.mubr.bf16.gmra.mrb[0].mxu0 %v841
  %v880 = vpop.f32.mrb[0].mxu0
  %v881 = vadd.f32 %v802, %v880
  %v882 = vpop.f32.mrb[0].mxu0
  %v883 = vpop.f32.mrb[0].mxu0
  %v884 = vadd.f32 %v805, %v883
  %v885 = vpop.f32.mrb[0].mxu0
  %886 = vmatprep.mubr.bf16.mxu0 0
  %887 = vmatmul.mubr.bf16.gmra.mrb[0].mxu0 %v844
  %v888 = vpop.f32.mrb[0].mxu0
  %v889 = vadd.f32 %v810, %v888
  %v890 = vpop.f32.mrb[0].mxu0
  %v891 = vpop.f32.mrb[0].mxu0
  %v892 = vadd.f32 %v813, %v891
  %v893 = vpop.f32.mrb[0].mxu0
  %894 = vdwg.mxu0
  %v895 = vld [vmem:[#allocation3 + $0x2] sm:$0xff]
  %v896 = vld [vmem:[#allocation3 + $0xa] sm:$0xff]
  %v897 = vld [vmem:[#allocation3 + $0x1a] sm:$0xff]
  %v898 = vld [vmem:[#allocation3 + $0x22] sm:$0xff]
  %v899 = vpack.c.bf16 %v896, %v895
  %v900 = vpack.c.bf16 %v898, %v897
  %s901 = scalar_lea.vmem %s4, 64
  %v902 = vld [vmem:[%s901] sm:$0xf]
  %v903 = vld [vmem:[%s901 + $0x4] sm:$0xf]
  %v904 = vld [vmem:[%s901 + $0x8] sm:$0xf]
  %v905 = vld [vmem:[%s901 + $0xc] sm:$0xf]
  %v906 = vld [vmem:[%s901 + $0x10] sm:$0xf]
  %v907 = vld [vmem:[%s901 + $0x14] sm:$0xf]
  %v908 = vld [vmem:[%s901 + $0x18] sm:$0xf]
  %v909 = vld [vmem:[%s901 + $0x1c] sm:$0xf]
  %v918 = vunpack.c.l.b16 %v902
  %v919 = vunpack.c.l.b16 %v903
  %v920 = vunpack.c.l.b16 %v904
  %v921 = vunpack.c.l.b16 %v905
  %v922 = vunpack.c.l.b16 %v906
  %v923 = vunpack.c.l.b16 %v907
  %v924 = vunpack.c.l.b16 %v908
  %v925 = vunpack.c.l.b16 %v909
  %v926 = vpack.c.b16 %v919, %v918
  %v927 = vpack.c.b16 %v921, %v920
  %v928 = vpack.c.b16 %v923, %v922
  %v929 = vpack.c.b16 %v925, %v924
  %v935 = vsel %vm42, %v899, 0
  %v938 = vsel %vm42, %v900, 0
  %940 = vmatprep.subr.bf16.mxu0 0
  %941 = vmatpush1.bf16.msra.mxu0 %v926
  %942 = vmatprep.subr.bf16.mxu0 0
  %943 = vmatpush1.bf16.msra.mxu0 %v927
  %944 = vmatprep.subr.bf16.mxu0 0
  %945 = vmatpush1.bf16.msra.mxu0 %v928
  %946 = vmatprep.subr.bf16.mxu0 0
  %947 = vmatpush1.bf16.msra.mxu0 %v929
  %948 = vmatprep.subr.bf16.mxu0 0
  %949 = vmatpush1.bf16.msra.mxu0 0
  %950 = vmatprep.subr.bf16.mxu0 0
  %951 = vmatpush1.bf16.msra.mxu0 0
  %952 = vmatprep.subr.bf16.mxu0 0
  %953 = vmatpush1.bf16.msra.mxu0 0
  %954 = vmatprep.subr.bf16.mxu0 0
  %955 = vmatpush1.bf16.msra.mxu0 0
  %956 = vmatprep.subr.bf16.mxu0 0
  %957 = vmatpush1.bf16.msra.mxu0 0
  %958 = vmatprep.subr.bf16.mxu0 0
  %959 = vmatpush1.bf16.msra.mxu0 0
  %960 = vmatprep.subr.bf16.mxu0 0
  %961 = vmatpush1.bf16.msra.mxu0 0
  %962 = vmatprep.subr.bf16.mxu0 0
  %963 = vmatpush1.bf16.msra.mxu0 0
  %964 = vmatprep.subr.bf16.mxu0 0
  %965 = vmatpush1.bf16.msra.mxu0 0
  %966 = vmatprep.subr.bf16.mxu0 0
  %967 = vmatpush1.bf16.msra.mxu0 0
  %968 = vmatprep.subr.bf16.mxu0 0
  %969 = vmatpush1.bf16.msra.mxu0 0
  %970 = vmatprep.subr.bf16.mxu0 0
  %971 = vmatpush1.bf16.msra.mxu0 0
  %972 = vmatprep.mubr.bf16.mxu0 0
  %973 = vmatmul.mubr.bf16.gmra.mrb[0].mxu0 %v935
  %v974 = vpop.f32.mrb[0].mxu0
  %v975 = vadd.f32 0.0, %v974
  %v976 = vpop.f32.mrb[0].mxu0
  %v977 = vpop.f32.mrb[0].mxu0
  %v978 = vadd.f32 0.0, %v977
  %v979 = vpop.f32.mrb[0].mxu0
  %980 = vmatprep.mubr.bf16.mxu0 0
  %981 = vmatmul.mubr.bf16.gmra.mrb[0].mxu0 %v938
  %v982 = vpop.f32.mrb[0].mxu0
  %v983 = vadd.f32 0.0, %v982
  %v984 = vpop.f32.mrb[0].mxu0
  %v985 = vpop.f32.mrb[0].mxu0
  %v986 = vadd.f32 0.0, %v985
  %v987 = vpop.f32.mrb[0].mxu0
  %988 = vdwg.mxu0
  %v989 = vadd.f32 %v881, %v975
  %v990 = vadd.f32 %v884, %v978
  %v991 = vadd.f32 %v889, %v983
  %v992 = vadd.f32 %v892, %v986
  %v993 = vld [vmem:[%s5] sm:$0x1]
  %v994 = vld [vmem:[%s6] sm:$0x1]
  %v995 = vsel %vm42, %v989, 0.0
  %v996 = vsel %vm42, %v990, 0.0
  %v997 = vadd.f32 %v995, %v996
  %v998 = vsel %vm42, %v991, 0.0
  %v999 = vadd.f32 %v997, %v998
  %v1000 = vsel %vm42, %v992, 0.0
  %v1001 = vadd.f32 %v999, %v1000
  %v1002 = vrot.slane %v1001, 4
  %v1003 = vadd.f32 %v1001, %v1002
  %v1004 = vrot.slane %v1003, 2
  %v1005 = vadd.f32 %v1003, %v1004
  %v1006 = vrot.slane %v1005, 1
  %v1007 = vadd.f32 %v1005, %v1006
  %v1008 = vmul.f32 %v989, %v989
  %v1009 = vmul.f32 %v990, %v990
  %v1010 = vmul.f32 %v991, %v991
  %v1011 = vmul.f32 %v992, %v992
  %v1012 = vsel %vm42, %v1008, 0.0
  %v1013 = vsel %vm42, %v1009, 0.0
  %v1014 = vadd.f32 %v1012, %v1013
  %v1015 = vsel %vm42, %v1010, 0.0
  %v1016 = vadd.f32 %v1014, %v1015
  %v1017 = vsel %vm42, %v1011, 0.0
  %v1018 = vadd.f32 %v1016, %v1017
  %v1019 = vrot.slane %v1018, 4
  %v1020 = vadd.f32 %v1018, %v1019
  %v1021 = vrot.slane %v1020, 2
  %v1022 = vadd.f32 %v1020, %v1021
  %v1023 = vrot.slane %v1022, 1
  %v1024 = vadd.f32 %v1022, %v1023
  %v1025 = vld [vmem:[%s7] sm:$0xff]
  %v1026 = vld [vmem:[%s7 + $0x8] sm:$0xff]
  %v1027 = vld [vmem:[%s7 + $0x10] sm:$0xff]
  %v1028 = vld [vmem:[%s7 + $0x18] sm:$0xff]
  %v1029 = vld [vmem:[%s7 + $0x20] sm:$0xff]
  %v1030 = vld [vmem:[%s7 + $0x28] sm:$0xff]
  %v1031 = vld [vmem:[%s7 + $0x30] sm:$0xff]
  %v1032 = vld [vmem:[%s7 + $0x38] sm:$0xff]
  %v1034 = vsel %vm42, %v1007, 0
  %1036 = vmatprep.subr.mxu0 0.0
  %1037 = vmatpush1.msra.mxu0 %v1025
  %1038 = vmatprep.subr.mxu0 0.0
  %1039 = vmatpush1.msra.mxu0 %v1026
  %1040 = vmatprep.subr.mxu0 0.0
  %1041 = vmatpush1.msra.mxu0 %v1027
  %1042 = vmatprep.subr.mxu0 0.0
  %1043 = vmatpush1.msra.mxu0 %v1028
  %1044 = vmatprep.subr.mxu0 0.0
  %1045 = vmatpush1.msra.mxu0 %v1029
  %1046 = vmatprep.subr.mxu0 0.0
  %1047 = vmatpush1.msra.mxu0 %v1030
  %1048 = vmatprep.subr.mxu0 0.0
  %1049 = vmatpush1.msra.mxu0 %v1031
  %1050 = vmatprep.subr.mxu0 0.0
  %1051 = vmatpush1.msra.mxu0 %v1032
  %1052 = vmatprep.subr.mxu0 0.0
  %1053 = vmatpush1.msra.mxu0 0.0
  %1054 = vmatprep.subr.mxu0 0.0
  %1055 = vmatpush1.msra.mxu0 0.0
  %1056 = vmatprep.subr.mxu0 0.0
  %1057 = vmatpush1.msra.mxu0 0.0
  %1058 = vmatprep.subr.mxu0 0.0
  %1059 = vmatpush1.msra.mxu0 0.0
  %1060 = vmatprep.subr.mxu0 0.0
  %1061 = vmatpush1.msra.mxu0 0.0
  %1062 = vmatprep.subr.mxu0 0.0
  %1063 = vmatpush1.msra.mxu0 0.0
  %1064 = vmatprep.subr.mxu0 0.0
  %1065 = vmatpush1.msra.mxu0 0.0
  %1066 = vmatprep.subr.mxu0 0.0
  %1067 = vmatpush1.msra.mxu0 0.0
  %1068 = vmatprep.subr.mxu0 0.0
  %1069 = vmatpush1.msra.mxu0 0.0
  %1070 = vmatprep.subr.mxu0 0.0
  %1071 = vmatpush1.msra.mxu0 0.0
  %1072 = vmatprep.subr.mxu0 0.0
  %1073 = vmatpush1.msra.mxu0 0.0
  %1074 = vmatprep.subr.mxu0 0.0
  %1075 = vmatpush1.msra.mxu0 0.0
  %1076 = vmatprep.subr.mxu0 0.0
  %1077 = vmatpush1.msra.mxu0 0.0
  %1078 = vmatprep.subr.mxu0 0.0
  %1079 = vmatpush1.msra.mxu0 0.0
  %1080 = vmatprep.subr.mxu0 0.0
  %1081 = vmatpush1.msra.mxu0 0.0
  %1082 = vmatprep.subr.mxu0 0.0
  %1083 = vmatpush1.msra.mxu0 0.0
  %1084 = vmatprep.subr.mxu0 0.0
  %1085 = vmatpush1.msra.mxu0 0.0
  %1086 = vmatprep.subr.mxu0 0.0
  %1087 = vmatpush1.msra.mxu0 0.0
  %1088 = vmatprep.subr.mxu0 0.0
  %1089 = vmatpush1.msra.mxu0 0.0
  %1090 = vmatprep.subr.mxu0 0.0
  %1091 = vmatpush1.msra.mxu0 0.0
  %1092 = vmatprep.subr.mxu0 0.0
  %1093 = vmatpush1.msra.mxu0 0.0
  %1094 = vmatprep.subr.mxu0 0.0
  %1095 = vmatpush1.msra.mxu0 0.0
  %1096 = vmatprep.subr.mxu0 0.0
  %1097 = vmatpush1.msra.mxu0 0.0
  %1098 = vmatprep.subr.mxu0 0.0
  %1099 = vmatpush1.msra.mxu0 0.0
  %1100 = vmatprep.mubr.f32.mxu0 0.0
  %1101 = vmatmul.mubr.f32.gmra.mrb[0].mxu0 %v1034
  %v1102 = vpop.f32.mrb[0].mxu0
  %v1103 = vadd.f32 0.0, %v1102
  %v1104 = vpop.f32.mrb[0].mxu0
  %1105 = vdwg.mxu0
  %v1107 = vsel %vm42, %v1024, 0
  %1109 = vmatprep.subr.mxu0 0.0
  %1110 = vmatpush1.msra.mxu0 %v1025
  %1111 = vmatprep.subr.mxu0 0.0
  %1112 = vmatpush1.msra.mxu0 %v1026
  %1113 = vmatprep.subr.mxu0 0.0
  %1114 = vmatpush1.msra.mxu0 %v1027
  %1115 = vmatprep.subr.mxu0 0.0
  %1116 = vmatpush1.msra.mxu0 %v1028
  %1117 = vmatprep.subr.mxu0 0.0
  %1118 = vmatpush1.msra.mxu0 %v1029
  %1119 = vmatprep.subr.mxu0 0.0
  %1120 = vmatpush1.msra.mxu0 %v1030
  %1121 = vmatprep.subr.mxu0 0.0
  %1122 = vmatpush1.msra.mxu0 %v1031
  %1123 = vmatprep.subr.mxu0 0.0
  %1124 = vmatpush1.msra.mxu0 %v1032
  %1125 = vmatprep.subr.mxu0 0.0
  %1126 = vmatpush1.msra.mxu0 0.0
  %1127 = vmatprep.subr.mxu0 0.0
  %1128 = vmatpush1.msra.mxu0 0.0
  %1129 = vmatprep.subr.mxu0 0.0
  %1130 = vmatpush1.msra.mxu0 0.0
  %1131 = vmatprep.subr.mxu0 0.0
  %1132 = vmatpush1.msra.mxu0 0.0
  %1133 = vmatprep.subr.mxu0 0.0
  %1134 = vmatpush1.msra.mxu0 0.0
  %1135 = vmatprep.subr.mxu0 0.0
  %1136 = vmatpush1.msra.mxu0 0.0
  %1137 = vmatprep.subr.mxu0 0.0
  %1138 = vmatpush1.msra.mxu0 0.0
  %1139 = vmatprep.subr.mxu0 0.0
  %1140 = vmatpush1.msra.mxu0 0.0
  %1141 = vmatprep.subr.mxu0 0.0
  %1142 = vmatpush1.msra.mxu0 0.0
  %1143 = vmatprep.subr.mxu0 0.0
  %1144 = vmatpush1.msra.mxu0 0.0
  %1145 = vmatprep.subr.mxu0 0.0
  %1146 = vmatpush1.msra.mxu0 0.0
  %1147 = vmatprep.subr.mxu0 0.0
  %1148 = vmatpush1.msra.mxu0 0.0
  %1149 = vmatprep.subr.mxu0 0.0
  %1150 = vmatpush1.msra.mxu0 0.0
  %1151 = vmatprep.subr.mxu0 0.0
  %1152 = vmatpush1.msra.mxu0 0.0
  %1153 = vmatprep.subr.mxu0 0.0
  %1154 = vmatpush1.msra.mxu0 0.0
  %1155 = vmatprep.subr.mxu0 0.0
  %1156 = vmatpush1.msra.mxu0 0.0
  %1157 = vmatprep.subr.mxu0 0.0
  %1158 = vmatpush1.msra.mxu0 0.0
  %1159 = vmatprep.subr.mxu0 0.0
  %1160 = vmatpush1.msra.mxu0 0.0
  %1161 = vmatprep.subr.mxu0 0.0
  %1162 = vmatpush1.msra.mxu0 0.0
  %1163 = vmatprep.subr.mxu0 0.0
  %1164 = vmatpush1.msra.mxu0 0.0
  %1165 = vmatprep.subr.mxu0 0.0
  %1166 = vmatpush1.msra.mxu0 0.0
  %1167 = vmatprep.subr.mxu0 0.0
  %1168 = vmatpush1.msra.mxu0 0.0
  %1169 = vmatprep.subr.mxu0 0.0
  %1170 = vmatpush1.msra.mxu0 0.0
  %1171 = vmatprep.subr.mxu0 0.0
  %1172 = vmatpush1.msra.mxu0 0.0
  %1173 = vmatprep.mubr.f32.mxu0 0.0
  %1174 = vmatmul.mubr.f32.gmra.mrb[0].mxu0 %v1107
  %v1175 = vpop.f32.mrb[0].mxu0
  %v1176 = vadd.f32 0.0, %v1175
  %v1177 = vpop.f32.mrb[0].mxu0
  %1178 = vdwg.mxu0
  %v1179 = vmul.f32 %v1103, %v518
  %v1180 = vmul.f32 %v1176, %v518
  %v1181 = vmul.f32 %v1179, %v1179
  %v1182 = vsub.f32 %v1180, %v1181
  %v1183 = vadd.f32 %v1182, 1e-05
  %v1184 = vrsqrt.pop %v1183
  %v1185 = vmul.f32 %v993, %v1184
  %v1186 = vmul.f32 %v1179, %v1185
  %v1187 = vsub.f32 %v994, %v1186
  %v1188 = vld [vmem:[%s8] sm:$0xf]
  %v1190 = vsel %vm529, %v1185, 0
  %v1193 = vsel %vm533, %v1188, 0
  %1195 = vmatprep.subr.mxu0 0.0
  %1196 = vmatpush1.msra.mxu0 %v1193
  %1197 = vmatprep.subr.mxu0 0.0
  %1198 = vmatpush1.msra.mxu0 0.0
  %1199 = vmatprep.subr.mxu0 0.0
  %1200 = vmatpush1.msra.mxu0 0.0
  %1201 = vmatprep.subr.mxu0 0.0
  %1202 = vmatpush1.msra.mxu0 0.0
  %1203 = vmatprep.subr.mxu0 0.0
  %1204 = vmatpush1.msra.mxu0 0.0
  %1205 = vmatprep.subr.mxu0 0.0
  %1206 = vmatpush1.msra.mxu0 0.0
  %1207 = vmatprep.subr.mxu0 0.0
  %1208 = vmatpush1.msra.mxu0 0.0
  %1209 = vmatprep.subr.mxu0 0.0
  %1210 = vmatpush1.msra.mxu0 0.0
  %1211 = vmatprep.subr.mxu0 0.0
  %1212 = vmatpush1.msra.mxu0 0.0
  %1213 = vmatprep.subr.mxu0 0.0
  %1214 = vmatpush1.msra.mxu0 0.0
  %1215 = vmatprep.subr.mxu0 0.0
  %1216 = vmatpush1.msra.mxu0 0.0
  %1217 = vmatprep.subr.mxu0 0.0
  %1218 = vmatpush1.msra.mxu0 0.0
  %1219 = vmatprep.subr.mxu0 0.0
  %1220 = vmatpush1.msra.mxu0 0.0
  %1221 = vmatprep.subr.mxu0 0.0
  %1222 = vmatpush1.msra.mxu0 0.0
  %1223 = vmatprep.subr.mxu0 0.0
  %1224 = vmatpush1.msra.mxu0 0.0
  %1225 = vmatprep.subr.mxu0 0.0
  %1226 = vmatpush1.msra.mxu0 0.0
  %1227 = vmatprep.subr.mxu0 0.0
  %1228 = vmatpush1.msra.mxu0 0.0
  %1229 = vmatprep.subr.mxu0 0.0
  %1230 = vmatpush1.msra.mxu0 0.0
  %1231 = vmatprep.subr.mxu0 0.0
  %1232 = vmatpush1.msra.mxu0 0.0
  %1233 = vmatprep.subr.mxu0 0.0
  %1234 = vmatpush1.msra.mxu0 0.0
  %1235 = vmatprep.subr.mxu0 0.0
  %1236 = vmatpush1.msra.mxu0 0.0
  %1237 = vmatprep.subr.mxu0 0.0
  %1238 = vmatpush1.msra.mxu0 0.0
  %1239 = vmatprep.subr.mxu0 0.0
  %1240 = vmatpush1.msra.mxu0 0.0
  %1241 = vmatprep.subr.mxu0 0.0
  %1242 = vmatpush1.msra.mxu0 0.0
  %1243 = vmatprep.subr.mxu0 0.0
  %1244 = vmatpush1.msra.mxu0 0.0
  %1245 = vmatprep.subr.mxu0 0.0
  %1246 = vmatpush1.msra.mxu0 0.0
  %1247 = vmatprep.subr.mxu0 0.0
  %1248 = vmatpush1.msra.mxu0 0.0
  %1249 = vmatprep.subr.mxu0 0.0
  %1250 = vmatpush1.msra.mxu0 0.0
  %1251 = vmatprep.subr.mxu0 0.0
  %1252 = vmatpush1.msra.mxu0 0.0
  %1253 = vmatprep.subr.mxu0 0.0
  %1254 = vmatpush1.msra.mxu0 0.0
  %1255 = vmatprep.subr.mxu0 0.0
  %1256 = vmatpush1.msra.mxu0 0.0
  %1257 = vmatprep.subr.mxu0 0.0
  %1258 = vmatpush1.msra.mxu0 0.0
  %1259 = vmatprep.mubr.f32.mxu0 0.0
  %1260 = vmatmul.mubr.f32.gmra.mrb[0].mxu0 %v1190
  %v1261 = vpop.f32.mrb[0].mxu0
  %v1262 = vadd.f32 0.0, %v1261
  %v1263 = vpop.f32.mrb[0].mxu0
  %1264 = vdwg.mxu0
  %v1266 = vsel %vm529, %v1187, 0
  %1268 = vmatprep.subr.mxu0 0.0
  %1269 = vmatpush1.msra.mxu0 %v1193
  %1270 = vmatprep.subr.mxu0 0.0
  %1271 = vmatpush1.msra.mxu0 0.0
  %1272 = vmatprep.subr.mxu0 0.0
  %1273 = vmatpush1.msra.mxu0 0.0
  %1274 = vmatprep.subr.mxu0 0.0
  %1275 = vmatpush1.msra.mxu0 0.0
  %1276 = vmatprep.subr.mxu0 0.0
  %1277 = vmatpush1.msra.mxu0 0.0
  %1278 = vmatprep.subr.mxu0 0.0
  %1279 = vmatpush1.msra.mxu0 0.0
  %1280 = vmatprep.subr.mxu0 0.0
  %1281 = vmatpush1.msra.mxu0 0.0
  %1282 = vmatprep.subr.mxu0 0.0
  %1283 = vmatpush1.msra.mxu0 0.0
  %1284 = vmatprep.subr.mxu0 0.0
  %1285 = vmatpush1.msra.mxu0 0.0
  %1286 = vmatprep.subr.mxu0 0.0
  %1287 = vmatpush1.msra.mxu0 0.0
  %1288 = vmatprep.subr.mxu0 0.0
  %1289 = vmatpush1.msra.mxu0 0.0
  %1290 = vmatprep.subr.mxu0 0.0
  %1291 = vmatpush1.msra.mxu0 0.0
  %1292 = vmatprep.subr.mxu0 0.0
  %1293 = vmatpush1.msra.mxu0 0.0
  %1294 = vmatprep.subr.mxu0 0.0
  %1295 = vmatpush1.msra.mxu0 0.0
  %1296 = vmatprep.subr.mxu0 0.0
  %1297 = vmatpush1.msra.mxu0 0.0
  %1298 = vmatprep.subr.mxu0 0.0
  %1299 = vmatpush1.msra.mxu0 0.0
  %1300 = vmatprep.subr.mxu0 0.0
  %1301 = vmatpush1.msra.mxu0 0.0
  %1302 = vmatprep.subr.mxu0 0.0
  %1303 = vmatpush1.msra.mxu0 0.0
  %1304 = vmatprep.subr.mxu0 0.0
  %1305 = vmatpush1.msra.mxu0 0.0
  %1306 = vmatprep.subr.mxu0 0.0
  %1307 = vmatpush1.msra.mxu0 0.0
  %1308 = vmatprep.subr.mxu0 0.0
  %1309 = vmatpush1.msra.mxu0 0.0
  %1310 = vmatprep.subr.mxu0 0.0
  %1311 = vmatpush1.msra.mxu0 0.0
  %1312 = vmatprep.subr.mxu0 0.0
  %1313 = vmatpush1.msra.mxu0 0.0
  %1314 = vmatprep.subr.mxu0 0.0
  %1315 = vmatpush1.msra.mxu0 0.0
  %1316 = vmatprep.subr.mxu0 0.0
  %1317 = vmatpush1.msra.mxu0 0.0
  %1318 = vmatprep.subr.mxu0 0.0
  %1319 = vmatpush1.msra.mxu0 0.0
  %1320 = vmatprep.subr.mxu0 0.0
  %1321 = vmatpush1.msra.mxu0 0.0
  %1322 = vmatprep.subr.mxu0 0.0
  %1323 = vmatpush1.msra.mxu0 0.0
  %1324 = vmatprep.subr.mxu0 0.0
  %1325 = vmatpush1.msra.mxu0 0.0
  %1326 = vmatprep.subr.mxu0 0.0
  %1327 = vmatpush1.msra.mxu0 0.0
  %1328 = vmatprep.subr.mxu0 0.0
  %1329 = vmatpush1.msra.mxu0 0.0
  %1330 = vmatprep.subr.mxu0 0.0
  %1331 = vmatpush1.msra.mxu0 0.0
  %1332 = vmatprep.mubr.f32.mxu0 0.0
  %1333 = vmatmul.mubr.f32.gmra.mrb[0].mxu0 %v1266
  %v1334 = vpop.f32.mrb[0].mxu0
  %v1335 = vadd.f32 0.0, %v1334
  %v1336 = vpop.f32.mrb[0].mxu0
  %1337 = vdwg.mxu0
  %v1338 = vlaneseq
  %v1339 = vshrl.u32 %v1338, 7
  %v1340 = vsub.s32 0, %v1339
  %v1341 = vrot.slane %v1262, %v1340
  %v1342 = vmul.f32 %v989, %v1341
  %v1343 = vmul.f32 %v990, %v1341
  %v1344 = vmul.f32 %v991, %v1341
  %v1345 = vmul.f32 %v992, %v1341
  %v1346 = vlaneseq
  %v1347 = vshrl.u32 %v1346, 7
  %v1348 = vsub.s32 0, %v1347
  %v1349 = vrot.slane %v1335, %v1348
  %v1350 = vadd.f32 %v1342, %v1349
  %v1351 = vadd.f32 %v1343, %v1349
  %v1352 = vadd.f32 %v1344, %v1349
  %v1353 = vadd.f32 %v1345, %v1349
  %v1354 = vld [vmem:[#allocation2 + $0x1] sm:$0xff]
  %v1355 = vld [vmem:[#allocation2 + $0x9] sm:$0xff]
  %v1356 = vld [vmem:[#allocation2 + $0x19] sm:$0xff]
  %v1357 = vld [vmem:[#allocation2 + $0x21] sm:$0xff]
  %v1358 = vadd.f32 %v1350, %v1354
  %v1359 = vadd.f32 %v1351, %v1355
  %v1360 = vadd.f32 %v1352, %v1356
  %v1361 = vadd.f32 %v1353, %v1357
  %v1362 = vmax.f32 %v1358, 0.0
  %v1363 = vmax.f32 %v1359, 0.0
  %v1364 = vmax.f32 %v1360, 0.0
  %v1365 = vmax.f32 %v1361, 0.0
  %1366 = vst.msk [vmem:[%s9] sm:$0xff] %vm42, %v1362
  %1367 = vst.msk [vmem:[%s9 + $0x8] sm:$0xff] %vm42, %v1363
  %1368 = vst.msk [vmem:[%s9 + $0x10] sm:$0xff] %vm42, %v1364
  %1369 = vst.msk [vmem:[%s9 + $0x18] sm:$0xff] %vm42, %v1365
  // Predicated region
  $region38: #{basic_block_forward.1} parent=0 // pred_check
    _
  $region39: #{basic_block_forward.1} parent=0 // pred_check_branch
    %1371 = sbr.rel (0) target = $region41
  $region40: #{basic_block_forward.1} parent=0 // pred_region
    _
  $region41: #{basic_block_forward.1} parent=0 // pred_fallthru
    _
  // Predicated region
  $region42: #{basic_block_forward.1} parent=0 // pred_check
    _
  $region43: #{basic_block_forward.1} parent=0 // pred_check_branch
    %1373 = sbr.rel (0) target = $region45
  $region44: #{basic_block_forward.1} parent=0 // pred_region
    _
  $region45: #{basic_block_forward.1} parent=0 // pred_fallthru
    _

</llo_original>
